<compile_context>
chip_gen: v6e
topology: v6e:2x2x1
jax: 0.10.0
libtpu: 0.0.40
codegen_flags: <defaults>
</compile_context>

<pallas_src>
import numpy as np
import jax
import jax.numpy as jnp
from jax.experimental import pallas as pl
from jax.experimental.pallas import tpu as pltpu


BATCH_TILE = 128   # batch lives on the lane axis; one full vreg lane width per tile
PAD_ROWS = 8       # rows appended to h^T: [1, 0, ..., 0] (bias lane + alignment pad)


def make_lstm_kernel(num_layers, hidden_dim):
    H = hidden_dim
    L = num_layers

    def kernel(x_ref, w_ref, out_ref):
        # x_ref   (K, Bt)       augmented x^T: rows 0:H features (zero padded),
        #                       row H == 1.0 (bias lane), rows H+1:K == 0.
        # w_ref   (L+1, 3H, K)  packed weights, gate ROW order [i | g | o]
        #                       (i/o rows pre-scaled by 0.5, dead f gate dropped),
        #                       column H = combined bias b_ih + b_hh (folded into
        #                       the matmul via the constant-1 row of h_aug);
        #                       slab L row 0 = [0.5*w_out | 0.5*b_out | 0 ...].
        # out_ref (1, Bt)       lane-dense sigmoid output row.
        h_aug = x_ref[...]                        # (K, Bt)
        tail = h_aug[H:, :]                       # (8, Bt) == [1; 0; ...; 0], loop invariant

        for l in range(L):                        # static unroll; strictly serial chain
            # gates^T = W_l (3H, K) @ h_aug (K, Bt); bias comes free from column H.
            # TODO(synk): bf16 operands -> one native MXU pass/layer, needs ~1e-3 tol.
            gates = jnp.dot(w_ref[l], h_aug, preferred_element_type=jnp.float32)
            t = jnp.tanh(gates)                   # one EUP pass over the whole tile
            # Gate slices are 8-aligned sublane groups -> pure VPU, no cross-lane moves.
            sig_i = 0.5 * t[0:H, :] + 0.5         # sigmoid(z) = 0.5*tanh(0.5*z) + 0.5
            tanh_g = t[H:2 * H, :]
            sig_o = 0.5 * t[2 * H:3 * H, :] + 0.5
            c = sig_i * tanh_g                    # sigmoid(f) * c0 == 0 -> f dropped
            h = sig_o * jnp.tanh(c)               # (H, Bt)
            h_aug = jnp.concatenate([h, tail], axis=0)   # re-augment for the bias fold

        # Output head: sigmoid(w_out . h + b_out); batch on lanes -> one small MXU
        # pass with N = Bt, result already lane dense.
        s = jnp.dot(w_ref[L][0:8, :], h_aug, preferred_element_type=jnp.float32)  # (8, Bt)
        out_ref[...] = 0.5 * jnp.tanh(s[0:1, :]) + 0.5

    return kernel


def lstm_forward(x, packed, *, input_dim, hidden_dim, num_layers):
    """x: (B, input_dim) f32 -> (B, 1) f32."""
    B = x.shape[0]
    H = hidden_dim
    K = H + PAD_ROWS
    Bt = BATCH_TILE
    B_pad = ((B + Bt - 1) // Bt) * Bt

    # Batch on lanes: feed x^T, zero-pad features to H and batch to a lane multiple,
    # append the constant-1 bias row plus zero rows up to K.  Padded batch columns
    # compute garbage and are sliced off below.
    x_aug = jnp.concatenate(
        [
            jnp.pad(x.astype(jnp.float32).T, ((0, H - input_dim), (0, B_pad - B))),
            jnp.ones((1, B_pad), jnp.float32),
            jnp.zeros((K - H - 1, B_pad), jnp.float32),
        ],
        axis=0,
    )                                                         # (K, B_pad)

    kernel = make_lstm_kernel(num_layers, H)
    out = pl.pallas_call(
        kernel,
        out_shape=jax.ShapeDtypeStruct((1, B_pad), jnp.float32),
        grid=(B_pad // Bt,),
        in_specs=[
            pl.BlockSpec((K, Bt), lambda i: (0, i)),
            pl.BlockSpec(packed.shape, lambda i: (0, 0, 0)),   # weights stay VMEM-resident
        ],
        out_specs=pl.BlockSpec((1, Bt), lambda i: (0, i)),
        compiler_params=pltpu.CompilerParams(
            # Independent batch tiles: shards across both TensorCores on v7x once
            # B > BATCH_TILE; harmless no-op on single-TC v5e/v6e.
            dimension_semantics=("parallel",),
        ),
    )(x_aug, packed)
    return out[0, :B].reshape(B, 1)


def init_params(key, input_dim, hidden_dim, num_layers):
    """PyTorch-style params (uniform(-1/sqrt(H), 1/sqrt(H))).

    W_hh matrices are omitted: with seq_len == 1 and h0 == 0 their contribution is
    identically zero, so they never affect the forward pass.
    """
    H, L = hidden_dim, num_layers
    k = 1.0 / np.sqrt(H)
    keys = jax.random.split(key, 6)
    w_ih0 = jax.random.uniform(keys[0], (4 * H, input_dim), jnp.float32, -k, k)
    w_ih_rest = jax.random.uniform(keys[1], (L - 1, 4 * H, H), jnp.float32, -k, k)
    b_ih = jax.random.uniform(keys[2], (L, 4 * H), jnp.float32, -k, k)
    b_hh = jax.random.uniform(keys[3], (L, 4 * H), jnp.float32, -k, k)
    w_out = jax.random.uniform(keys[4], (1, H), jnp.float32, -k, k)
    b_out = jax.random.uniform(keys[5], (1,), jnp.float32, -k, k)
    return w_ih0, w_ih_rest, b_ih, b_hh, w_out, b_out


def pack_params(params, *, input_dim, hidden_dim, num_layers):
    """Pack everything into one (L+1, 3H, H+8) f32 buffer (single HBM->VMEM DMA).

    Row order along 3H is [i | g | o] (dead f gate dropped), laid out for
    gates^T = W @ h^T.  i/o rows are pre-scaled by 0.5 (sigmoid-via-tanh fold);
    column H holds the combined bias (consumed by the constant-1 row of h^T).
    Slab L row 0 holds the output head [0.5*w_out | 0.5*b_out | 0 ...].
    """
    H, L = hidden_dim, num_layers
    K = H + PAD_ROWS
    w_ih0, w_ih_rest, b_ih, b_hh, w_out, b_out = params
    assert input_dim <= H, "packed layout assumes input_dim <= hidden_dim"

    # PyTorch gate order along 4H is [i, f, g, o]; keep [i, g, o].
    sel = np.concatenate([np.arange(0, H), np.arange(2 * H, 3 * H), np.arange(3 * H, 4 * H)])
    row_scale = np.ones((3 * H, 1), np.float32)
    row_scale[0:H] = 0.5
    row_scale[2 * H:3 * H] = 0.5

    packed = np.zeros((L + 1, 3 * H, K), np.float32)
    packed[0, :, :input_dim] = np.asarray(w_ih0)[sel, :] * row_scale
    for l in range(1, L):
        packed[l, :, :H] = np.asarray(w_ih_rest[l - 1])[sel, :] * row_scale
    bias = (np.asarray(b_ih) + np.asarray(b_hh))[:, sel] * row_scale[:, 0][None, :]   # (L, 3H)
    packed[:L, :, H] = bias
    packed[L, 0, :H] = 0.5 * np.asarray(w_out)[0]
    packed[L, 0, H] = 0.5 * float(np.asarray(b_out)[0])
    return jnp.asarray(packed)


def reference_forward(x, params, *, hidden_dim, num_layers):
    """Pure-JAX f32 reference with the exact PyTorch single-step LSTM math."""
    H, L = hidden_dim, num_layers
    w_ih0, w_ih_rest, b_ih, b_hh, w_out, b_out = params

    def cell(h_in, w_ih, b):
        gates = h_in @ w_ih.T + b                         # (B, 4H), gate order i,f,g,o
        i = jax.nn.sigmoid(gates[:, 0 * H:1 * H])
        g = jnp.tanh(gates[:, 2 * H:3 * H])
        o = jax.nn.sigmoid(gates[:, 3 * H:4 * H])
        c = i * g                                         # + sigmoid(f) * c0, c0 == 0
        return o * jnp.tanh(c)

    h = cell(x, w_ih0, b_ih[0] + b_hh[0])
    for l in range(1, L):
        h = cell(h, w_ih_rest[l - 1], b_ih[l] + b_hh[l])
    return jax.nn.sigmoid(h @ w_out.T + b_out)


if __name__ == "__main__":
    batch = 4
    input_dim = 8
    hidden_dim = 16
    num_layers = 16

    key = jax.random.PRNGKey(0)
    kx, kp = jax.random.split(key)
    x = jax.random.normal(kx, (batch, input_dim), jnp.float32)
    params = init_params(kp, input_dim, hidden_dim, num_layers)
    packed = pack_params(params, input_dim=input_dim, hidden_dim=hidden_dim,
                         num_layers=num_layers)

    out = lstm_forward(x, packed, input_dim=input_dim, hidden_dim=hidden_dim,
                       num_layers=num_layers)
    out = jax.block_until_ready(out)

    ref = reference_forward(x, params, hidden_dim=hidden_dim, num_layers=num_layers)
    ref = jax.block_until_ready(ref)

    assert out.shape == (batch, 1), out.shape
    np.testing.assert_allclose(np.asarray(out), np.asarray(ref), rtol=1e-5, atol=1e-5)
    print("KERNEL_OK")
</pallas_src>

<mosaic_0001>
module attributes {stable_mosaic.version = 11 : i64} {
  func.func @kernel(%arg0: i32, %arg1: memref<24x128xf32, #tpu.memory_space<vmem>>, %arg2: memref<17x48x24xf32, #tpu.memory_space<vmem>>, %arg3: memref<1x128xf32, #tpu.memory_space<vmem>>) attributes {dimension_semantics = [#tpu.dimension_semantics<parallel>], iteration_bounds = array<i64: 1>, scalar_prefetch = 0 : i64, scratch_operands = 0 : i64, tpu.core_type = #tpu.core_type<tc>, window_params = [{transform_indices = @transform_0, window_bounds = array<i64: 24, 128>}, {pipeline_mode = #tpu.pipeline_mode<synchronous>, transform_indices = @transform_1, window_bounds = array<i64: 17, 48, 24>}, {transform_indices = @transform_2, window_bounds = array<i64: 1, 128>}]} {
    %c0 = arith.constant 0 : index
    %c0_0 = arith.constant 0 : index
    %0 = vector.load %arg1[%c0, %c0_0] : memref<24x128xf32, #tpu.memory_space<vmem>>, vector<24x128xf32>
    %1 = vector.extract_strided_slice %0 {offsets = [16, 0], sizes = [8, 128], strides = [1, 1]} : vector<24x128xf32> to vector<8x128xf32>
    %c0_1 = arith.constant 0 : index
    %c0_2 = arith.constant 0 : index
    %c0_3 = arith.constant 0 : index
    %2 = vector.load %arg2[%c0_1, %c0_2, %c0_3] : memref<17x48x24xf32, #tpu.memory_space<vmem>>, vector<1x48x24xf32>
    %3 = vector.shape_cast %2 : vector<1x48x24xf32> to vector<48x24xf32>
    %cst = arith.constant dense<0.000000e+00> : vector<48x128xf32>
    %4 = tpu.matmul %3, %0, %cst {dimension_numbers = #tpu.dot_dimension_numbers<[1], [0], [0], [1], [0, 0, 1, 1], [], []>} : vector<48x24xf32>, vector<24x128xf32>, vector<48x128xf32> -> vector<48x128xf32>
    %5 = math.tanh %4 : vector<48x128xf32>
    %6 = vector.extract_strided_slice %5 {offsets = [0, 0], sizes = [16, 128], strides = [1, 1]} : vector<48x128xf32> to vector<16x128xf32>
    %cst_4 = arith.constant 5.000000e-01 : f32
    %7 = vector.broadcast %cst_4 : f32 to vector<16x128xf32>
    %8 = arith.mulf %7, %6 : vector<16x128xf32>
    %cst_5 = arith.constant 5.000000e-01 : f32
    %9 = vector.broadcast %cst_5 : f32 to vector<16x128xf32>
    %10 = arith.addf %8, %9 : vector<16x128xf32>
    %11 = vector.extract_strided_slice %5 {offsets = [16, 0], sizes = [16, 128], strides = [1, 1]} : vector<48x128xf32> to vector<16x128xf32>
    %12 = vector.extract_strided_slice %5 {offsets = [32, 0], sizes = [16, 128], strides = [1, 1]} : vector<48x128xf32> to vector<16x128xf32>
    %cst_6 = arith.constant 5.000000e-01 : f32
    %13 = vector.broadcast %cst_6 : f32 to vector<16x128xf32>
    %14 = arith.mulf %13, %12 : vector<16x128xf32>
    %cst_7 = arith.constant 5.000000e-01 : f32
    %15 = vector.broadcast %cst_7 : f32 to vector<16x128xf32>
    %16 = arith.addf %14, %15 : vector<16x128xf32>
    %17 = arith.mulf %10, %11 : vector<16x128xf32>
    %18 = math.tanh %17 : vector<16x128xf32>
    %19 = arith.mulf %16, %18 : vector<16x128xf32>
    %20 = tpu.concatenate %19, %1 in 0 : vector<16x128xf32>, vector<8x128xf32> -> vector<24x128xf32>
    %c1 = arith.constant 1 : index
    %c0_8 = arith.constant 0 : index
    %c0_9 = arith.constant 0 : index
    %21 = vector.load %arg2[%c1, %c0_8, %c0_9] : memref<17x48x24xf32, #tpu.memory_space<vmem>>, vector<1x48x24xf32>
    %22 = vector.shape_cast %21 : vector<1x48x24xf32> to vector<48x24xf32>
    %cst_10 = arith.constant dense<0.000000e+00> : vector<48x128xf32>
    %23 = tpu.matmul %22, %20, %cst_10 {dimension_numbers = #tpu.dot_dimension_numbers<[1], [0], [0], [1], [0, 0, 1, 1], [], []>} : vector<48x24xf32>, vector<24x128xf32>, vector<48x128xf32> -> vector<48x128xf32>
    %24 = math.tanh %23 : vector<48x128xf32>
    %25 = vector.extract_strided_slice %24 {offsets = [0, 0], sizes = [16, 128], strides = [1, 1]} : vector<48x128xf32> to vector<16x128xf32>
    %cst_11 = arith.constant 5.000000e-01 : f32
    %26 = vector.broadcast %cst_11 : f32 to vector<16x128xf32>
    %27 = arith.mulf %26, %25 : vector<16x128xf32>
    %cst_12 = arith.constant 5.000000e-01 : f32
    %28 = vector.broadcast %cst_12 : f32 to vector<16x128xf32>
    %29 = arith.addf %27, %28 : vector<16x128xf32>
    %30 = vector.extract_strided_slice %24 {offsets = [16, 0], sizes = [16, 128], strides = [1, 1]} : vector<48x128xf32> to vector<16x128xf32>
    %31 = vector.extract_strided_slice %24 {offsets = [32, 0], sizes = [16, 128], strides = [1, 1]} : vector<48x128xf32> to vector<16x128xf32>
    %cst_13 = arith.constant 5.000000e-01 : f32
    %32 = vector.broadcast %cst_13 : f32 to vector<16x128xf32>
    %33 = arith.mulf %32, %31 : vector<16x128xf32>
    %cst_14 = arith.constant 5.000000e-01 : f32
    %34 = vector.broadcast %cst_14 : f32 to vector<16x128xf32>
    %35 = arith.addf %33, %34 : vector<16x128xf32>
    %36 = arith.mulf %29, %30 : vector<16x128xf32>
    %37 = math.tanh %36 : vector<16x128xf32>
    %38 = arith.mulf %35, %37 : vector<16x128xf32>
    %39 = tpu.concatenate %38, %1 in 0 : vector<16x128xf32>, vector<8x128xf32> -> vector<24x128xf32>
    %c2 = arith.constant 2 : index
    %c0_15 = arith.constant 0 : index
    %c0_16 = arith.constant 0 : index
    %40 = vector.load %arg2[%c2, %c0_15, %c0_16] : memref<17x48x24xf32, #tpu.memory_space<vmem>>, vector<1x48x24xf32>
    %41 = vector.shape_cast %40 : vector<1x48x24xf32> to vector<48x24xf32>
    %cst_17 = arith.constant dense<0.000000e+00> : vector<48x128xf32>
    %42 = tpu.matmul %41, %39, %cst_17 {dimension_numbers = #tpu.dot_dimension_numbers<[1], [0], [0], [1], [0, 0, 1, 1], [], []>} : vector<48x24xf32>, vector<24x128xf32>, vector<48x128xf32> -> vector<48x128xf32>
    %43 = math.tanh %42 : vector<48x128xf32>
    %44 = vector.extract_strided_slice %43 {offsets = [0, 0], sizes = [16, 128], strides = [1, 1]} : vector<48x128xf32> to vector<16x128xf32>
    %cst_18 = arith.constant 5.000000e-01 : f32
    %45 = vector.broadcast %cst_18 : f32 to vector<16x128xf32>
    %46 = arith.mulf %45, %44 : vector<16x128xf32>
    %cst_19 = arith.constant 5.000000e-01 : f32
    %47 = vector.broadcast %cst_19 : f32 to vector<16x128xf32>
    %48 = arith.addf %46, %47 : vector<16x128xf32>
    %49 = vector.extract_strided_slice %43 {offsets = [16, 0], sizes = [16, 128], strides = [1, 1]} : vector<48x128xf32> to vector<16x128xf32>
    %50 = vector.extract_strided_slice %43 {offsets = [32, 0], sizes = [16, 128], strides = [1, 1]} : vector<48x128xf32> to vector<16x128xf32>
    %cst_20 = arith.constant 5.000000e-01 : f32
    %51 = vector.broadcast %cst_20 : f32 to vector<16x128xf32>
    %52 = arith.mulf %51, %50 : vector<16x128xf32>
    %cst_21 = arith.constant 5.000000e-01 : f32
    %53 = vector.broadcast %cst_21 : f32 to vector<16x128xf32>
    %54 = arith.addf %52, %53 : vector<16x128xf32>
    %55 = arith.mulf %48, %49 : vector<16x128xf32>
    %56 = math.tanh %55 : vector<16x128xf32>
    %57 = arith.mulf %54, %56 : vector<16x128xf32>
    %58 = tpu.concatenate %57, %1 in 0 : vector<16x128xf32>, vector<8x128xf32> -> vector<24x128xf32>
    %c3 = arith.constant 3 : index
    %c0_22 = arith.constant 0 : index
    %c0_23 = arith.constant 0 : index
    %59 = vector.load %arg2[%c3, %c0_22, %c0_23] : memref<17x48x24xf32, #tpu.memory_space<vmem>>, vector<1x48x24xf32>
    %60 = vector.shape_cast %59 : vector<1x48x24xf32> to vector<48x24xf32>
    %cst_24 = arith.constant dense<0.000000e+00> : vector<48x128xf32>
    %61 = tpu.matmul %60, %58, %cst_24 {dimension_numbers = #tpu.dot_dimension_numbers<[1], [0], [0], [1], [0, 0, 1, 1], [], []>} : vector<48x24xf32>, vector<24x128xf32>, vector<48x128xf32> -> vector<48x128xf32>
    %62 = math.tanh %61 : vector<48x128xf32>
    %63 = vector.extract_strided_slice %62 {offsets = [0, 0], sizes = [16, 128], strides = [1, 1]} : vector<48x128xf32> to vector<16x128xf32>
    %cst_25 = arith.constant 5.000000e-01 : f32
    %64 = vector.broadcast %cst_25 : f32 to vector<16x128xf32>
    %65 = arith.mulf %64, %63 : vector<16x128xf32>
    %cst_26 = arith.constant 5.000000e-01 : f32
    %66 = vector.broadcast %cst_26 : f32 to vector<16x128xf32>
    %67 = arith.addf %65, %66 : vector<16x128xf32>
    %68 = vector.extract_strided_slice %62 {offsets = [16, 0], sizes = [16, 128], strides = [1, 1]} : vector<48x128xf32> to vector<16x128xf32>
    %69 = vector.extract_strided_slice %62 {offsets = [32, 0], sizes = [16, 128], strides = [1, 1]} : vector<48x128xf32> to vector<16x128xf32>
    %cst_27 = arith.constant 5.000000e-01 : f32
    %70 = vector.broadcast %cst_27 : f32 to vector<16x128xf32>
    %71 = arith.mulf %70, %69 : vector<16x128xf32>
    %cst_28 = arith.constant 5.000000e-01 : f32
    %72 = vector.broadcast %cst_28 : f32 to vector<16x128xf32>
    %73 = arith.addf %71, %72 : vector<16x128xf32>
    %74 = arith.mulf %67, %68 : vector<16x128xf32>
    %75 = math.tanh %74 : vector<16x128xf32>
    %76 = arith.mulf %73, %75 : vector<16x128xf32>
    %77 = tpu.concatenate %76, %1 in 0 : vector<16x128xf32>, vector<8x128xf32> -> vector<24x128xf32>
    %c4 = arith.constant 4 : index
    %c0_29 = arith.constant 0 : index
    %c0_30 = arith.constant 0 : index
    %78 = vector.load %arg2[%c4, %c0_29, %c0_30] : memref<17x48x24xf32, #tpu.memory_space<vmem>>, vector<1x48x24xf32>
    %79 = vector.shape_cast %78 : vector<1x48x24xf32> to vector<48x24xf32>
    %cst_31 = arith.constant dense<0.000000e+00> : vector<48x128xf32>
    %80 = tpu.matmul %79, %77, %cst_31 {dimension_numbers = #tpu.dot_dimension_numbers<[1], [0], [0], [1], [0, 0, 1, 1], [], []>} : vector<48x24xf32>, vector<24x128xf32>, vector<48x128xf32> -> vector<48x128xf32>
    %81 = math.tanh %80 : vector<48x128xf32>
    %82 = vector.extract_strided_slice %81 {offsets = [0, 0], sizes = [16, 128], strides = [1, 1]} : vector<48x128xf32> to vector<16x128xf32>
    %cst_32 = arith.constant 5.000000e-01 : f32
    %83 = vector.broadcast %cst_32 : f32 to vector<16x128xf32>
    %84 = arith.mulf %83, %82 : vector<16x128xf32>
    %cst_33 = arith.constant 5.000000e-01 : f32
    %85 = vector.broadcast %cst_33 : f32 to vector<16x128xf32>
    %86 = arith.addf %84, %85 : vector<16x128xf32>
    %87 = vector.extract_strided_slice %81 {offsets = [16, 0], sizes = [16, 128], strides = [1, 1]} : vector<48x128xf32> to vector<16x128xf32>
    %88 = vector.extract_strided_slice %81 {offsets = [32, 0], sizes = [16, 128], strides = [1, 1]} : vector<48x128xf32> to vector<16x128xf32>
    %cst_34 = arith.constant 5.000000e-01 : f32
    %89 = vector.broadcast %cst_34 : f32 to vector<16x128xf32>
    %90 = arith.mulf %89, %88 : vector<16x128xf32>
    %cst_35 = arith.constant 5.000000e-01 : f32
    %91 = vector.broadcast %cst_35 : f32 to vector<16x128xf32>
    %92 = arith.addf %90, %91 : vector<16x128xf32>
    %93 = arith.mulf %86, %87 : vector<16x128xf32>
    %94 = math.tanh %93 : vector<16x128xf32>
    %95 = arith.mulf %92, %94 : vector<16x128xf32>
    %96 = tpu.concatenate %95, %1 in 0 : vector<16x128xf32>, vector<8x128xf32> -> vector<24x128xf32>
    %c5 = arith.constant 5 : index
    %c0_36 = arith.constant 0 : index
    %c0_37 = arith.constant 0 : index
    %97 = vector.load %arg2[%c5, %c0_36, %c0_37] : memref<17x48x24xf32, #tpu.memory_space<vmem>>, vector<1x48x24xf32>
    %98 = vector.shape_cast %97 : vector<1x48x24xf32> to vector<48x24xf32>
    %cst_38 = arith.constant dense<0.000000e+00> : vector<48x128xf32>
    %99 = tpu.matmul %98, %96, %cst_38 {dimension_numbers = #tpu.dot_dimension_numbers<[1], [0], [0], [1], [0, 0, 1, 1], [], []>} : vector<48x24xf32>, vector<24x128xf32>, vector<48x128xf32> -> vector<48x128xf32>
    %100 = math.tanh %99 : vector<48x128xf32>
    %101 = vector.extract_strided_slice %100 {offsets = [0, 0], sizes = [16, 128], strides = [1, 1]} : vector<48x128xf32> to vector<16x128xf32>
    %cst_39 = arith.constant 5.000000e-01 : f32
    %102 = vector.broadcast %cst_39 : f32 to vector<16x128xf32>
    %103 = arith.mulf %102, %101 : vector<16x128xf32>
    %cst_40 = arith.constant 5.000000e-01 : f32
    %104 = vector.broadcast %cst_40 : f32 to vector<16x128xf32>
    %105 = arith.addf %103, %104 : vector<16x128xf32>
    %106 = vector.extract_strided_slice %100 {offsets = [16, 0], sizes = [16, 128], strides = [1, 1]} : vector<48x128xf32> to vector<16x128xf32>
    %107 = vector.extract_strided_slice %100 {offsets = [32, 0], sizes = [16, 128], strides = [1, 1]} : vector<48x128xf32> to vector<16x128xf32>
    %cst_41 = arith.constant 5.000000e-01 : f32
    %108 = vector.broadcast %cst_41 : f32 to vector<16x128xf32>
    %109 = arith.mulf %108, %107 : vector<16x128xf32>
    %cst_42 = arith.constant 5.000000e-01 : f32
    %110 = vector.broadcast %cst_42 : f32 to vector<16x128xf32>
    %111 = arith.addf %109, %110 : vector<16x128xf32>
    %112 = arith.mulf %105, %106 : vector<16x128xf32>
    %113 = math.tanh %112 : vector<16x128xf32>
    %114 = arith.mulf %111, %113 : vector<16x128xf32>
    %115 = tpu.concatenate %114, %1 in 0 : vector<16x128xf32>, vector<8x128xf32> -> vector<24x128xf32>
    %c6 = arith.constant 6 : index
    %c0_43 = arith.constant 0 : index
    %c0_44 = arith.constant 0 : index
    %116 = vector.load %arg2[%c6, %c0_43, %c0_44] : memref<17x48x24xf32, #tpu.memory_space<vmem>>, vector<1x48x24xf32>
    %117 = vector.shape_cast %116 : vector<1x48x24xf32> to vector<48x24xf32>
    %cst_45 = arith.constant dense<0.000000e+00> : vector<48x128xf32>
    %118 = tpu.matmul %117, %115, %cst_45 {dimension_numbers = #tpu.dot_dimension_numbers<[1], [0], [0], [1], [0, 0, 1, 1], [], []>} : vector<48x24xf32>, vector<24x128xf32>, vector<48x128xf32> -> vector<48x128xf32>
    %119 = math.tanh %118 : vector<48x128xf32>
    %120 = vector.extract_strided_slice %119 {offsets = [0, 0], sizes = [16, 128], strides = [1, 1]} : vector<48x128xf32> to vector<16x128xf32>
    %cst_46 = arith.constant 5.000000e-01 : f32
    %121 = vector.broadcast %cst_46 : f32 to vector<16x128xf32>
    %122 = arith.mulf %121, %120 : vector<16x128xf32>
    %cst_47 = arith.constant 5.000000e-01 : f32
    %123 = vector.broadcast %cst_47 : f32 to vector<16x128xf32>
    %124 = arith.addf %122, %123 : vector<16x128xf32>
    %125 = vector.extract_strided_slice %119 {offsets = [16, 0], sizes = [16, 128], strides = [1, 1]} : vector<48x128xf32> to vector<16x128xf32>
    %126 = vector.extract_strided_slice %119 {offsets = [32, 0], sizes = [16, 128], strides = [1, 1]} : vector<48x128xf32> to vector<16x128xf32>
    %cst_48 = arith.constant 5.000000e-01 : f32
    %127 = vector.broadcast %cst_48 : f32 to vector<16x128xf32>
    %128 = arith.mulf %127, %126 : vector<16x128xf32>
    %cst_49 = arith.constant 5.000000e-01 : f32
    %129 = vector.broadcast %cst_49 : f32 to vector<16x128xf32>
    %130 = arith.addf %128, %129 : vector<16x128xf32>
    %131 = arith.mulf %124, %125 : vector<16x128xf32>
    %132 = math.tanh %131 : vector<16x128xf32>
    %133 = arith.mulf %130, %132 : vector<16x128xf32>
    %134 = tpu.concatenate %133, %1 in 0 : vector<16x128xf32>, vector<8x128xf32> -> vector<24x128xf32>
    %c7 = arith.constant 7 : index
    %c0_50 = arith.constant 0 : index
    %c0_51 = arith.constant 0 : index
    %135 = vector.load %arg2[%c7, %c0_50, %c0_51] : memref<17x48x24xf32, #tpu.memory_space<vmem>>, vector<1x48x24xf32>
    %136 = vector.shape_cast %135 : vector<1x48x24xf32> to vector<48x24xf32>
    %cst_52 = arith.constant dense<0.000000e+00> : vector<48x128xf32>
    %137 = tpu.matmul %136, %134, %cst_52 {dimension_numbers = #tpu.dot_dimension_numbers<[1], [0], [0], [1], [0, 0, 1, 1], [], []>} : vector<48x24xf32>, vector<24x128xf32>, vector<48x128xf32> -> vector<48x128xf32>
    %138 = math.tanh %137 : vector<48x128xf32>
    %139 = vector.extract_strided_slice %138 {offsets = [0, 0], sizes = [16, 128], strides = [1, 1]} : vector<48x128xf32> to vector<16x128xf32>
    %cst_53 = arith.constant 5.000000e-01 : f32
    %140 = vector.broadcast %cst_53 : f32 to vector<16x128xf32>
    %141 = arith.mulf %140, %139 : vector<16x128xf32>
    %cst_54 = arith.constant 5.000000e-01 : f32
    %142 = vector.broadcast %cst_54 : f32 to vector<16x128xf32>
    %143 = arith.addf %141, %142 : vector<16x128xf32>
    %144 = vector.extract_strided_slice %138 {offsets = [16, 0], sizes = [16, 128], strides = [1, 1]} : vector<48x128xf32> to vector<16x128xf32>
    %145 = vector.extract_strided_slice %138 {offsets = [32, 0], sizes = [16, 128], strides = [1, 1]} : vector<48x128xf32> to vector<16x128xf32>
    %cst_55 = arith.constant 5.000000e-01 : f32
    %146 = vector.broadcast %cst_55 : f32 to vector<16x128xf32>
    %147 = arith.mulf %146, %145 : vector<16x128xf32>
    %cst_56 = arith.constant 5.000000e-01 : f32
    %148 = vector.broadcast %cst_56 : f32 to vector<16x128xf32>
    %149 = arith.addf %147, %148 : vector<16x128xf32>
    %150 = arith.mulf %143, %144 : vector<16x128xf32>
    %151 = math.tanh %150 : vector<16x128xf32>
    %152 = arith.mulf %149, %151 : vector<16x128xf32>
    %153 = tpu.concatenate %152, %1 in 0 : vector<16x128xf32>, vector<8x128xf32> -> vector<24x128xf32>
    %c8 = arith.constant 8 : index
    %c0_57 = arith.constant 0 : index
    %c0_58 = arith.constant 0 : index
    %154 = vector.load %arg2[%c8, %c0_57, %c0_58] : memref<17x48x24xf32, #tpu.memory_space<vmem>>, vector<1x48x24xf32>
    %155 = vector.shape_cast %154 : vector<1x48x24xf32> to vector<48x24xf32>
    %cst_59 = arith.constant dense<0.000000e+00> : vector<48x128xf32>
    %156 = tpu.matmul %155, %153, %cst_59 {dimension_numbers = #tpu.dot_dimension_numbers<[1], [0], [0], [1], [0, 0, 1, 1], [], []>} : vector<48x24xf32>, vector<24x128xf32>, vector<48x128xf32> -> vector<48x128xf32>
    %157 = math.tanh %156 : vector<48x128xf32>
    %158 = vector.extract_strided_slice %157 {offsets = [0, 0], sizes = [16, 128], strides = [1, 1]} : vector<48x128xf32> to vector<16x128xf32>
    %cst_60 = arith.constant 5.000000e-01 : f32
    %159 = vector.broadcast %cst_60 : f32 to vector<16x128xf32>
    %160 = arith.mulf %159, %158 : vector<16x128xf32>
    %cst_61 = arith.constant 5.000000e-01 : f32
    %161 = vector.broadcast %cst_61 : f32 to vector<16x128xf32>
    %162 = arith.addf %160, %161 : vector<16x128xf32>
    %163 = vector.extract_strided_slice %157 {offsets = [16, 0], sizes = [16, 128], strides = [1, 1]} : vector<48x128xf32> to vector<16x128xf32>
    %164 = vector.extract_strided_slice %157 {offsets = [32, 0], sizes = [16, 128], strides = [1, 1]} : vector<48x128xf32> to vector<16x128xf32>
    %cst_62 = arith.constant 5.000000e-01 : f32
    %165 = vector.broadcast %cst_62 : f32 to vector<16x128xf32>
    %166 = arith.mulf %165, %164 : vector<16x128xf32>
    %cst_63 = arith.constant 5.000000e-01 : f32
    %167 = vector.broadcast %cst_63 : f32 to vector<16x128xf32>
    %168 = arith.addf %166, %167 : vector<16x128xf32>
    %169 = arith.mulf %162, %163 : vector<16x128xf32>
    %170 = math.tanh %169 : vector<16x128xf32>
    %171 = arith.mulf %168, %170 : vector<16x128xf32>
    %172 = tpu.concatenate %171, %1 in 0 : vector<16x128xf32>, vector<8x128xf32> -> vector<24x128xf32>
    %c9 = arith.constant 9 : index
    %c0_64 = arith.constant 0 : index
    %c0_65 = arith.constant 0 : index
    %173 = vector.load %arg2[%c9, %c0_64, %c0_65] : memref<17x48x24xf32, #tpu.memory_space<vmem>>, vector<1x48x24xf32>
    %174 = vector.shape_cast %173 : vector<1x48x24xf32> to vector<48x24xf32>
    %cst_66 = arith.constant dense<0.000000e+00> : vector<48x128xf32>
    %175 = tpu.matmul %174, %172, %cst_66 {dimension_numbers = #tpu.dot_dimension_numbers<[1], [0], [0], [1], [0, 0, 1, 1], [], []>} : vector<48x24xf32>, vector<24x128xf32>, vector<48x128xf32> -> vector<48x128xf32>
    %176 = math.tanh %175 : vector<48x128xf32>
    %177 = vector.extract_strided_slice %176 {offsets = [0, 0], sizes = [16, 128], strides = [1, 1]} : vector<48x128xf32> to vector<16x128xf32>
    %cst_67 = arith.constant 5.000000e-01 : f32
    %178 = vector.broadcast %cst_67 : f32 to vector<16x128xf32>
    %179 = arith.mulf %178, %177 : vector<16x128xf32>
    %cst_68 = arith.constant 5.000000e-01 : f32
    %180 = vector.broadcast %cst_68 : f32 to vector<16x128xf32>
    %181 = arith.addf %179, %180 : vector<16x128xf32>
    %182 = vector.extract_strided_slice %176 {offsets = [16, 0], sizes = [16, 128], strides = [1, 1]} : vector<48x128xf32> to vector<16x128xf32>
    %183 = vector.extract_strided_slice %176 {offsets = [32, 0], sizes = [16, 128], strides = [1, 1]} : vector<48x128xf32> to vector<16x128xf32>
    %cst_69 = arith.constant 5.000000e-01 : f32
    %184 = vector.broadcast %cst_69 : f32 to vector<16x128xf32>
    %185 = arith.mulf %184, %183 : vector<16x128xf32>
    %cst_70 = arith.constant 5.000000e-01 : f32
    %186 = vector.broadcast %cst_70 : f32 to vector<16x128xf32>
    %187 = arith.addf %185, %186 : vector<16x128xf32>
    %188 = arith.mulf %181, %182 : vector<16x128xf32>
    %189 = math.tanh %188 : vector<16x128xf32>
    %190 = arith.mulf %187, %189 : vector<16x128xf32>
    %191 = tpu.concatenate %190, %1 in 0 : vector<16x128xf32>, vector<8x128xf32> -> vector<24x128xf32>
    %c10 = arith.constant 10 : index
    %c0_71 = arith.constant 0 : index
    %c0_72 = arith.constant 0 : index
    %192 = vector.load %arg2[%c10, %c0_71, %c0_72] : memref<17x48x24xf32, #tpu.memory_space<vmem>>, vector<1x48x24xf32>
    %193 = vector.shape_cast %192 : vector<1x48x24xf32> to vector<48x24xf32>
    %cst_73 = arith.constant dense<0.000000e+00> : vector<48x128xf32>
    %194 = tpu.matmul %193, %191, %cst_73 {dimension_numbers = #tpu.dot_dimension_numbers<[1], [0], [0], [1], [0, 0, 1, 1], [], []>} : vector<48x24xf32>, vector<24x128xf32>, vector<48x128xf32> -> vector<48x128xf32>
    %195 = math.tanh %194 : vector<48x128xf32>
    %196 = vector.extract_strided_slice %195 {offsets = [0, 0], sizes = [16, 128], strides = [1, 1]} : vector<48x128xf32> to vector<16x128xf32>
    %cst_74 = arith.constant 5.000000e-01 : f32
    %197 = vector.broadcast %cst_74 : f32 to vector<16x128xf32>
    %198 = arith.mulf %197, %196 : vector<16x128xf32>
    %cst_75 = arith.constant 5.000000e-01 : f32
    %199 = vector.broadcast %cst_75 : f32 to vector<16x128xf32>
    %200 = arith.addf %198, %199 : vector<16x128xf32>
    %201 = vector.extract_strided_slice %195 {offsets = [16, 0], sizes = [16, 128], strides = [1, 1]} : vector<48x128xf32> to vector<16x128xf32>
    %202 = vector.extract_strided_slice %195 {offsets = [32, 0], sizes = [16, 128], strides = [1, 1]} : vector<48x128xf32> to vector<16x128xf32>
    %cst_76 = arith.constant 5.000000e-01 : f32
    %203 = vector.broadcast %cst_76 : f32 to vector<16x128xf32>
    %204 = arith.mulf %203, %202 : vector<16x128xf32>
    %cst_77 = arith.constant 5.000000e-01 : f32
    %205 = vector.broadcast %cst_77 : f32 to vector<16x128xf32>
    %206 = arith.addf %204, %205 : vector<16x128xf32>
    %207 = arith.mulf %200, %201 : vector<16x128xf32>
    %208 = math.tanh %207 : vector<16x128xf32>
    %209 = arith.mulf %206, %208 : vector<16x128xf32>
    %210 = tpu.concatenate %209, %1 in 0 : vector<16x128xf32>, vector<8x128xf32> -> vector<24x128xf32>
    %c11 = arith.constant 11 : index
    %c0_78 = arith.constant 0 : index
    %c0_79 = arith.constant 0 : index
    %211 = vector.load %arg2[%c11, %c0_78, %c0_79] : memref<17x48x24xf32, #tpu.memory_space<vmem>>, vector<1x48x24xf32>
    %212 = vector.shape_cast %211 : vector<1x48x24xf32> to vector<48x24xf32>
    %cst_80 = arith.constant dense<0.000000e+00> : vector<48x128xf32>
    %213 = tpu.matmul %212, %210, %cst_80 {dimension_numbers = #tpu.dot_dimension_numbers<[1], [0], [0], [1], [0, 0, 1, 1], [], []>} : vector<48x24xf32>, vector<24x128xf32>, vector<48x128xf32> -> vector<48x128xf32>
    %214 = math.tanh %213 : vector<48x128xf32>
    %215 = vector.extract_strided_slice %214 {offsets = [0, 0], sizes = [16, 128], strides = [1, 1]} : vector<48x128xf32> to vector<16x128xf32>
    %cst_81 = arith.constant 5.000000e-01 : f32
    %216 = vector.broadcast %cst_81 : f32 to vector<16x128xf32>
    %217 = arith.mulf %216, %215 : vector<16x128xf32>
    %cst_82 = arith.constant 5.000000e-01 : f32
    %218 = vector.broadcast %cst_82 : f32 to vector<16x128xf32>
    %219 = arith.addf %217, %218 : vector<16x128xf32>
    %220 = vector.extract_strided_slice %214 {offsets = [16, 0], sizes = [16, 128], strides = [1, 1]} : vector<48x128xf32> to vector<16x128xf32>
    %221 = vector.extract_strided_slice %214 {offsets = [32, 0], sizes = [16, 128], strides = [1, 1]} : vector<48x128xf32> to vector<16x128xf32>
    %cst_83 = arith.constant 5.000000e-01 : f32
    %222 = vector.broadcast %cst_83 : f32 to vector<16x128xf32>
    %223 = arith.mulf %222, %221 : vector<16x128xf32>
    %cst_84 = arith.constant 5.000000e-01 : f32
    %224 = vector.broadcast %cst_84 : f32 to vector<16x128xf32>
    %225 = arith.addf %223, %224 : vector<16x128xf32>
    %226 = arith.mulf %219, %220 : vector<16x128xf32>
    %227 = math.tanh %226 : vector<16x128xf32>
    %228 = arith.mulf %225, %227 : vector<16x128xf32>
    %229 = tpu.concatenate %228, %1 in 0 : vector<16x128xf32>, vector<8x128xf32> -> vector<24x128xf32>
    %c12 = arith.constant 12 : index
    %c0_85 = arith.constant 0 : index
    %c0_86 = arith.constant 0 : index
    %230 = vector.load %arg2[%c12, %c0_85, %c0_86] : memref<17x48x24xf32, #tpu.memory_space<vmem>>, vector<1x48x24xf32>
    %231 = vector.shape_cast %230 : vector<1x48x24xf32> to vector<48x24xf32>
    %cst_87 = arith.constant dense<0.000000e+00> : vector<48x128xf32>
    %232 = tpu.matmul %231, %229, %cst_87 {dimension_numbers = #tpu.dot_dimension_numbers<[1], [0], [0], [1], [0, 0, 1, 1], [], []>} : vector<48x24xf32>, vector<24x128xf32>, vector<48x128xf32> -> vector<48x128xf32>
    %233 = math.tanh %232 : vector<48x128xf32>
    %234 = vector.extract_strided_slice %233 {offsets = [0, 0], sizes = [16, 128], strides = [1, 1]} : vector<48x128xf32> to vector<16x128xf32>
    %cst_88 = arith.constant 5.000000e-01 : f32
    %235 = vector.broadcast %cst_88 : f32 to vector<16x128xf32>
    %236 = arith.mulf %235, %234 : vector<16x128xf32>
    %cst_89 = arith.constant 5.000000e-01 : f32
    %237 = vector.broadcast %cst_89 : f32 to vector<16x128xf32>
    %238 = arith.addf %236, %237 : vector<16x128xf32>
    %239 = vector.extract_strided_slice %233 {offsets = [16, 0], sizes = [16, 128], strides = [1, 1]} : vector<48x128xf32> to vector<16x128xf32>
    %240 = vector.extract_strided_slice %233 {offsets = [32, 0], sizes = [16, 128], strides = [1, 1]} : vector<48x128xf32> to vector<16x128xf32>
    %cst_90 = arith.constant 5.000000e-01 : f32
    %241 = vector.broadcast %cst_90 : f32 to vector<16x128xf32>
    %242 = arith.mulf %241, %240 : vector<16x128xf32>
    %cst_91 = arith.constant 5.000000e-01 : f32
    %243 = vector.broadcast %cst_91 : f32 to vector<16x128xf32>
    %244 = arith.addf %242, %243 : vector<16x128xf32>
    %245 = arith.mulf %238, %239 : vector<16x128xf32>
    %246 = math.tanh %245 : vector<16x128xf32>
    %247 = arith.mulf %244, %246 : vector<16x128xf32>
    %248 = tpu.concatenate %247, %1 in 0 : vector<16x128xf32>, vector<8x128xf32> -> vector<24x128xf32>
    %c13 = arith.constant 13 : index
    %c0_92 = arith.constant 0 : index
    %c0_93 = arith.constant 0 : index
    %249 = vector.load %arg2[%c13, %c0_92, %c0_93] : memref<17x48x24xf32, #tpu.memory_space<vmem>>, vector<1x48x24xf32>
    %250 = vector.shape_cast %249 : vector<1x48x24xf32> to vector<48x24xf32>
    %cst_94 = arith.constant dense<0.000000e+00> : vector<48x128xf32>
    %251 = tpu.matmul %250, %248, %cst_94 {dimension_numbers = #tpu.dot_dimension_numbers<[1], [0], [0], [1], [0, 0, 1, 1], [], []>} : vector<48x24xf32>, vector<24x128xf32>, vector<48x128xf32> -> vector<48x128xf32>
    %252 = math.tanh %251 : vector<48x128xf32>
    %253 = vector.extract_strided_slice %252 {offsets = [0, 0], sizes = [16, 128], strides = [1, 1]} : vector<48x128xf32> to vector<16x128xf32>
    %cst_95 = arith.constant 5.000000e-01 : f32
    %254 = vector.broadcast %cst_95 : f32 to vector<16x128xf32>
    %255 = arith.mulf %254, %253 : vector<16x128xf32>
    %cst_96 = arith.constant 5.000000e-01 : f32
    %256 = vector.broadcast %cst_96 : f32 to vector<16x128xf32>
    %257 = arith.addf %255, %256 : vector<16x128xf32>
    %258 = vector.extract_strided_slice %252 {offsets = [16, 0], sizes = [16, 128], strides = [1, 1]} : vector<48x128xf32> to vector<16x128xf32>
    %259 = vector.extract_strided_slice %252 {offsets = [32, 0], sizes = [16, 128], strides = [1, 1]} : vector<48x128xf32> to vector<16x128xf32>
    %cst_97 = arith.constant 5.000000e-01 : f32
    %260 = vector.broadcast %cst_97 : f32 to vector<16x128xf32>
    %261 = arith.mulf %260, %259 : vector<16x128xf32>
    %cst_98 = arith.constant 5.000000e-01 : f32
    %262 = vector.broadcast %cst_98 : f32 to vector<16x128xf32>
    %263 = arith.addf %261, %262 : vector<16x128xf32>
    %264 = arith.mulf %257, %258 : vector<16x128xf32>
    %265 = math.tanh %264 : vector<16x128xf32>
    %266 = arith.mulf %263, %265 : vector<16x128xf32>
    %267 = tpu.concatenate %266, %1 in 0 : vector<16x128xf32>, vector<8x128xf32> -> vector<24x128xf32>
    %c14 = arith.constant 14 : index
    %c0_99 = arith.constant 0 : index
    %c0_100 = arith.constant 0 : index
    %268 = vector.load %arg2[%c14, %c0_99, %c0_100] : memref<17x48x24xf32, #tpu.memory_space<vmem>>, vector<1x48x24xf32>
    %269 = vector.shape_cast %268 : vector<1x48x24xf32> to vector<48x24xf32>
    %cst_101 = arith.constant dense<0.000000e+00> : vector<48x128xf32>
    %270 = tpu.matmul %269, %267, %cst_101 {dimension_numbers = #tpu.dot_dimension_numbers<[1], [0], [0], [1], [0, 0, 1, 1], [], []>} : vector<48x24xf32>, vector<24x128xf32>, vector<48x128xf32> -> vector<48x128xf32>
    %271 = math.tanh %270 : vector<48x128xf32>
    %272 = vector.extract_strided_slice %271 {offsets = [0, 0], sizes = [16, 128], strides = [1, 1]} : vector<48x128xf32> to vector<16x128xf32>
    %cst_102 = arith.constant 5.000000e-01 : f32
    %273 = vector.broadcast %cst_102 : f32 to vector<16x128xf32>
    %274 = arith.mulf %273, %272 : vector<16x128xf32>
    %cst_103 = arith.constant 5.000000e-01 : f32
    %275 = vector.broadcast %cst_103 : f32 to vector<16x128xf32>
    %276 = arith.addf %274, %275 : vector<16x128xf32>
    %277 = vector.extract_strided_slice %271 {offsets = [16, 0], sizes = [16, 128], strides = [1, 1]} : vector<48x128xf32> to vector<16x128xf32>
    %278 = vector.extract_strided_slice %271 {offsets = [32, 0], sizes = [16, 128], strides = [1, 1]} : vector<48x128xf32> to vector<16x128xf32>
    %cst_104 = arith.constant 5.000000e-01 : f32
    %279 = vector.broadcast %cst_104 : f32 to vector<16x128xf32>
    %280 = arith.mulf %279, %278 : vector<16x128xf32>
    %cst_105 = arith.constant 5.000000e-01 : f32
    %281 = vector.broadcast %cst_105 : f32 to vector<16x128xf32>
    %282 = arith.addf %280, %281 : vector<16x128xf32>
    %283 = arith.mulf %276, %277 : vector<16x128xf32>
    %284 = math.tanh %283 : vector<16x128xf32>
    %285 = arith.mulf %282, %284 : vector<16x128xf32>
    %286 = tpu.concatenate %285, %1 in 0 : vector<16x128xf32>, vector<8x128xf32> -> vector<24x128xf32>
    %c15 = arith.constant 15 : index
    %c0_106 = arith.constant 0 : index
    %c0_107 = arith.constant 0 : index
    %287 = vector.load %arg2[%c15, %c0_106, %c0_107] : memref<17x48x24xf32, #tpu.memory_space<vmem>>, vector<1x48x24xf32>
    %288 = vector.shape_cast %287 : vector<1x48x24xf32> to vector<48x24xf32>
    %cst_108 = arith.constant dense<0.000000e+00> : vector<48x128xf32>
    %289 = tpu.matmul %288, %286, %cst_108 {dimension_numbers = #tpu.dot_dimension_numbers<[1], [0], [0], [1], [0, 0, 1, 1], [], []>} : vector<48x24xf32>, vector<24x128xf32>, vector<48x128xf32> -> vector<48x128xf32>
    %290 = math.tanh %289 : vector<48x128xf32>
    %291 = vector.extract_strided_slice %290 {offsets = [0, 0], sizes = [16, 128], strides = [1, 1]} : vector<48x128xf32> to vector<16x128xf32>
    %cst_109 = arith.constant 5.000000e-01 : f32
    %292 = vector.broadcast %cst_109 : f32 to vector<16x128xf32>
    %293 = arith.mulf %292, %291 : vector<16x128xf32>
    %cst_110 = arith.constant 5.000000e-01 : f32
    %294 = vector.broadcast %cst_110 : f32 to vector<16x128xf32>
    %295 = arith.addf %293, %294 : vector<16x128xf32>
    %296 = vector.extract_strided_slice %290 {offsets = [16, 0], sizes = [16, 128], strides = [1, 1]} : vector<48x128xf32> to vector<16x128xf32>
    %297 = vector.extract_strided_slice %290 {offsets = [32, 0], sizes = [16, 128], strides = [1, 1]} : vector<48x128xf32> to vector<16x128xf32>
    %cst_111 = arith.constant 5.000000e-01 : f32
    %298 = vector.broadcast %cst_111 : f32 to vector<16x128xf32>
    %299 = arith.mulf %298, %297 : vector<16x128xf32>
    %cst_112 = arith.constant 5.000000e-01 : f32
    %300 = vector.broadcast %cst_112 : f32 to vector<16x128xf32>
    %301 = arith.addf %299, %300 : vector<16x128xf32>
    %302 = arith.mulf %295, %296 : vector<16x128xf32>
    %303 = math.tanh %302 : vector<16x128xf32>
    %304 = arith.mulf %301, %303 : vector<16x128xf32>
    %305 = tpu.concatenate %304, %1 in 0 : vector<16x128xf32>, vector<8x128xf32> -> vector<24x128xf32>
    %c16 = arith.constant 16 : index
    %c0_113 = arith.constant 0 : index
    %c0_114 = arith.constant 0 : index
    %306 = vector.load %arg2[%c16, %c0_113, %c0_114] : memref<17x48x24xf32, #tpu.memory_space<vmem>>, vector<1x48x24xf32>
    %307 = vector.shape_cast %306 : vector<1x48x24xf32> to vector<48x24xf32>
    %308 = vector.extract_strided_slice %307 {offsets = [0, 0], sizes = [8, 24], strides = [1, 1]} : vector<48x24xf32> to vector<8x24xf32>
    %cst_115 = arith.constant dense<0.000000e+00> : vector<8x128xf32>
    %309 = tpu.matmul %308, %305, %cst_115 {dimension_numbers = #tpu.dot_dimension_numbers<[1], [0], [0], [1], [0, 0, 1, 1], [], []>} : vector<8x24xf32>, vector<24x128xf32>, vector<8x128xf32> -> vector<8x128xf32>
    %310 = vector.extract_strided_slice %309 {offsets = [0, 0], sizes = [1, 128], strides = [1, 1]} : vector<8x128xf32> to vector<1x128xf32>
    %311 = math.tanh %310 : vector<1x128xf32>
    %cst_116 = arith.constant 5.000000e-01 : f32
    %312 = vector.broadcast %cst_116 : f32 to vector<1x128xf32>
    %313 = arith.mulf %312, %311 : vector<1x128xf32>
    %cst_117 = arith.constant 5.000000e-01 : f32
    %314 = vector.broadcast %cst_117 : f32 to vector<1x128xf32>
    %315 = arith.addf %313, %314 : vector<1x128xf32>
    %c0_118 = arith.constant 0 : index
    %c0_119 = arith.constant 0 : index
    %316 = vector.load %arg3[%c0_118, %c0_119] : memref<1x128xf32, #tpu.memory_space<vmem>>, vector<1x128xf32>
    tpu.vector_store %arg3[%c0_118, %c0_119], %315 {strides = array<i32>} : memref<1x128xf32, #tpu.memory_space<vmem>>, vector<1x128xf32>,
    return
  }
  func.func @transform_0(%arg0: i32) -> (i32, i32) {
    %c0_i32 = arith.constant 0 : i32
    %c0_i32_0 = arith.constant 0 : i32
    return %c0_i32, %arg0 : i32, i32
  }
  func.func @transform_1(%arg0: i32) -> (i32, i32, i32) {
    %c0_i32 = arith.constant 0 : i32
    %c0_i32_0 = arith.constant 0 : i32
    %c0_i32_1 = arith.constant 0 : i32
    %c0_i32_2 = arith.constant 0 : i32
    return %c0_i32, %c0_i32_0, %c0_i32_1 : i32, i32, i32
  }
  func.func @transform_2(%arg0: i32) -> (i32, i32) {
    %c0_i32 = arith.constant 0 : i32
    %c0_i32_0 = arith.constant 0 : i32
    return %c0_i32, %arg0 : i32, i32
  }
}

</mosaic_0001>

<llo_original>
// kernel: tpu_custom_call.1
$region0: #{tpu_custom_call.1}
  #allocation0 [shape = 'u32[]', space=smem, size = 0x4, offset = 0x4, fixed_abs, tag = 'smem constant byte address 0x4 - core index']
  #allocation1 [shape = 'u32[144,128]{1,0:T(1,128)}', space=vmem, size = 0x12000, scoped, tag = 'internal scratch']
  %s0 = inlined_call_operand.vmem [shape: f32[24,128], index: 0, kind: input, shape index: {}]
  %s1 = inlined_call_operand.vmem [shape: f32[17,48,24], index: 1, kind: input, shape index: {}]
  %s2 = inlined_call_operand.hbm [shape: f32[1,128], index: 2, kind: output, shape index: {}]
  %s3 = sld [smem:[#allocation0]]
  $region18: #{tpu_custom_call.1} parent=0
    _
  %s5 = ssub.s32 1, %s3
  %s6 = scalar_select 0, %s5, %s3
  $region1: #{tpu_custom_call.1} parent=0
    #allocation2 [shape = 'u8[512]{0}', space=vmem, size = 0x400, scoped, tag = 'output window, operand 0, single buffered']
    #allocation3 [shape = 's32[1]{0}', space=sflag, size = 0x4, scoped, tag = 'scoped memory for tpu_custom_call.1']
    %7 = vsyncpa [#allocation3], 0
    // Predicated region
    $region2: #{tpu_custom_call.1} parent=1 // pred_check
      _
    $region3: #{tpu_custom_call.1} parent=1 // pred_check_branch
      %9 = sbr.rel (0) target = $region5
    $region4: #{tpu_custom_call.1} parent=1 // pred_region
      _
    $region5: #{tpu_custom_call.1} parent=1 // pred_fallthru
      _
    // Predicated region
    $region6: #{tpu_custom_call.1} parent=1 // pred_check
      _
    $region7: #{tpu_custom_call.1} parent=1 // pred_check_branch
      %11 = sbr.rel (0) target = $region9
    $region8: #{tpu_custom_call.1} parent=1 // pred_region
      _
    $region9: #{tpu_custom_call.1} parent=1 // pred_fallthru
      _
    %v12 = vld [vmem:[%s0] sm:$0xff]
    %v13 = vld [vmem:[%s0 + $0x8] sm:$0xff]
    %v14 = vld [vmem:[%s0 + $0x10] sm:$0xff]
    %v15 = vld [vmem:[%s1] sm:$0xff]
    %v16 = vld [vmem:[%s1 + $0x8] sm:$0xff]
    %v17 = vld [vmem:[%s1 + $0x10] sm:$0xff]
    %v18 = vld [vmem:[%s1 + $0x18] sm:$0xff]
    %v19 = vld [vmem:[%s1 + $0x20] sm:$0xff]
    %v20 = vld [vmem:[%s1 + $0x28] sm:$0xff]
    %vm21 = vcmask 195584
    %v23 = vsel %vm21, %v15, 0
    %v26 = vsel %vm21, %v16, 0
    %v29 = vsel %vm21, %v17, 0
    %v32 = vsel %vm21, %v18, 0
    %v35 = vsel %vm21, %v19, 0
    %v38 = vsel %vm21, %v20, 0
    %40 = vmatprep.subr.mxu0 0.0
    %41 = vmatpush1.msra.mxu0 0.0
    %42 = vmatprep.subr.mxu0 0.0
    %43 = vmatpush1.msra.mxu0 0.0
    %44 = vmatprep.subr.mxu0 0.0
    %45 = vmatpush1.msra.mxu0 0.0
    %46 = vmatprep.subr.mxu0 0.0
    %47 = vmatpush1.msra.mxu0 0.0
    %48 = vmatprep.subr.mxu0 0.0
    %49 = vmatpush1.msra.mxu0 0.0
    %50 = vmatprep.subr.mxu0 0.0
    %51 = vmatpush1.msra.mxu0 0.0
    %52 = vmatprep.subr.mxu0 0.0
    %53 = vmatpush1.msra.mxu0 0.0
    %54 = vmatprep.subr.mxu0 0.0
    %55 = vmatpush1.msra.mxu0 0.0
    %56 = vmatprep.subr.mxu0 0.0
    %57 = vmatpush1.msra.mxu0 0.0
    %58 = vmatprep.subr.mxu0 0.0
    %59 = vmatpush1.msra.mxu0 0.0
    %60 = vmatprep.subr.mxu0 0.0
    %61 = vmatpush1.msra.mxu0 0.0
    %62 = vmatprep.subr.mxu0 0.0
    %63 = vmatpush1.msra.mxu0 0.0
    %64 = vmatprep.subr.mxu0 0.0
    %65 = vmatpush1.msra.mxu0 0.0
    %66 = vmatprep.subr.mxu0 0.0
    %67 = vmatpush1.msra.mxu0 %v14
    %68 = vmatprep.subr.mxu0 0.0
    %69 = vmatpush1.msra.mxu0 %v13
    %70 = vmatprep.subr.mxu0 0.0
    %71 = vmatpush1.msra.mxu0 %v12
    %72 = vmatprep.subr.mxu0 0.0
    %73 = vmatpush2.msra.mxu0 0.0
    %74 = vmatprep.subr.mxu0 0.0
    %75 = vmatpush2.msra.mxu0 0.0
    %76 = vmatprep.subr.mxu0 0.0
    %77 = vmatpush2.msra.mxu0 0.0
    %78 = vmatprep.subr.mxu0 0.0
    %79 = vmatpush2.msra.mxu0 0.0
    %80 = vmatprep.subr.mxu0 0.0
    %81 = vmatpush2.msra.mxu0 0.0
    %82 = vmatprep.subr.mxu0 0.0
    %83 = vmatpush2.msra.mxu0 0.0
    %84 = vmatprep.subr.mxu0 0.0
    %85 = vmatpush2.msra.mxu0 0.0
    %86 = vmatprep.subr.mxu0 0.0
    %87 = vmatpush2.msra.mxu0 0.0
    %88 = vmatprep.subr.mxu0 0.0
    %89 = vmatpush2.msra.mxu0 0.0
    %90 = vmatprep.subr.mxu0 0.0
    %91 = vmatpush2.msra.mxu0 0.0
    %92 = vmatprep.subr.mxu0 0.0
    %93 = vmatpush2.msra.mxu0 0.0
    %94 = vmatprep.subr.mxu0 0.0
    %95 = vmatpush2.msra.mxu0 0.0
    %96 = vmatprep.subr.mxu0 0.0
    %97 = vmatpush2.msra.mxu0 0.0
    %98 = vmatprep.subr.mxu0 0.0
    %99 = vmatpush2.msra.mxu0 0.0
    %100 = vmatprep.subr.mxu0 0.0
    %101 = vmatpush2.msra.mxu0 0.0
    %102 = vmatprep.subr.mxu0 0.0
    %103 = vmatpush2.msra.mxu0 0.0
    %104 = vmatprep.mubr.f32.mxu0 0.0
    %105 = vmatmul.mubr.f32.gmra.mxu0 %v23
    %v106 = vpop.f32.mrf.mxu0
    %v107 = vadd.f32 0.0, %v106
    %v108 = vpop.f32.mrf.mxu0
    %109 = vmatprep.mubr.f32.mxu0 0.0
    %110 = vmatmul.mubr.f32.gmra.mxu0 %v26
    %v111 = vpop.f32.mrf.mxu0
    %v112 = vadd.f32 0.0, %v111
    %v113 = vpop.f32.mrf.mxu0
    %114 = vmatprep.mubr.f32.mxu0 0.0
    %115 = vmatmul.mubr.f32.gmra.mxu0 %v29
    %v116 = vpop.f32.mrf.mxu0
    %v117 = vadd.f32 0.0, %v116
    %v118 = vpop.f32.mrf.mxu0
    %119 = vmatprep.mubr.f32.mxu0 0.0
    %120 = vmatmul.mubr.f32.gmra.mxu0 %v32
    %v121 = vpop.f32.mrf.mxu0
    %v122 = vadd.f32 0.0, %v121
    %v123 = vpop.f32.mrf.mxu0
    %124 = vmatprep.mubr.f32.mxu0 0.0
    %125 = vmatmul.mubr.f32.gmra.mxu0 %v35
    %v126 = vpop.f32.mrf.mxu0
    %v127 = vadd.f32 0.0, %v126
    %v128 = vpop.f32.mrf.mxu0
    %129 = vmatprep.mubr.f32.mxu0 0.0
    %130 = vmatmul.mubr.f32.gmra.mxu0 %v38
    %v131 = vpop.f32.mrf.mxu0
    %v132 = vadd.f32 0.0, %v131
    %v133 = vpop.f32.mrf.mxu0
    %134 = vdwg.mxu0
    %v135 = vtanh.pop %v107
    %v136 = vtanh.pop %v112
    %v137 = vtanh.pop %v117
    %v138 = vtanh.pop %v122
    %v139 = vtanh.pop %v127
    %v140 = vtanh.pop %v132
    %v141 = vmul.f32 %v135, 0.5
    %v142 = vmul.f32 %v136, 0.5
    %v143 = vadd.f32 %v141, 0.5
    %v144 = vadd.f32 %v142, 0.5
    %v145 = vmul.f32 %v139, 0.5
    %v146 = vmul.f32 %v140, 0.5
    %v147 = vadd.f32 %v145, 0.5
    %v148 = vadd.f32 %v146, 0.5
    %v149 = vmul.f32 %v143, %v137
    %v150 = vmul.f32 %v144, %v138
    %v151 = vtanh.pop %v149
    %v152 = vtanh.pop %v150
    %v153 = vmul.f32 %v147, %v151
    %v154 = vmul.f32 %v148, %v152
    %s155 = scalar_lea.vmem %s1, 48
    %v156 = vld [vmem:[%s155] sm:$0xff]
    %v157 = vld [vmem:[%s155 + $0x8] sm:$0xff]
    %v158 = vld [vmem:[%s155 + $0x10] sm:$0xff]
    %v159 = vld [vmem:[%s155 + $0x18] sm:$0xff]
    %v160 = vld [vmem:[%s155 + $0x20] sm:$0xff]
    %v161 = vld [vmem:[%s155 + $0x28] sm:$0xff]
    %v163 = vsel %vm21, %v156, 0
    %v166 = vsel %vm21, %v157, 0
    %v169 = vsel %vm21, %v158, 0
    %v172 = vsel %vm21, %v159, 0
    %v175 = vsel %vm21, %v160, 0
    %v178 = vsel %vm21, %v161, 0
    %180 = vmatprep.subr.mxu0 0.0
    %181 = vmatpush1.msra.mxu0 0.0
    %182 = vmatprep.subr.mxu0 0.0
    %183 = vmatpush1.msra.mxu0 0.0
    %184 = vmatprep.subr.mxu0 0.0
    %185 = vmatpush1.msra.mxu0 0.0
    %186 = vmatprep.subr.mxu0 0.0
    %187 = vmatpush1.msra.mxu0 0.0
    %188 = vmatprep.subr.mxu0 0.0
    %189 = vmatpush1.msra.mxu0 0.0
    %190 = vmatprep.subr.mxu0 0.0
    %191 = vmatpush1.msra.mxu0 0.0
    %192 = vmatprep.subr.mxu0 0.0
    %193 = vmatpush1.msra.mxu0 0.0
    %194 = vmatprep.subr.mxu0 0.0
    %195 = vmatpush1.msra.mxu0 0.0
    %196 = vmatprep.subr.mxu0 0.0
    %197 = vmatpush1.msra.mxu0 0.0
    %198 = vmatprep.subr.mxu0 0.0
    %199 = vmatpush1.msra.mxu0 0.0
    %200 = vmatprep.subr.mxu0 0.0
    %201 = vmatpush1.msra.mxu0 0.0
    %202 = vmatprep.subr.mxu0 0.0
    %203 = vmatpush1.msra.mxu0 0.0
    %204 = vmatprep.subr.mxu0 0.0
    %205 = vmatpush1.msra.mxu0 0.0
    %206 = vmatprep.subr.mxu0 0.0
    %207 = vmatpush1.msra.mxu0 %v14
    %208 = vmatprep.subr.mxu0 0.0
    %209 = vmatpush1.msra.mxu0 %v154
    %210 = vmatprep.subr.mxu0 0.0
    %211 = vmatpush1.msra.mxu0 %v153
    %212 = vmatprep.subr.mxu0 0.0
    %213 = vmatpush2.msra.mxu0 0.0
    %214 = vmatprep.subr.mxu0 0.0
    %215 = vmatpush2.msra.mxu0 0.0
    %216 = vmatprep.subr.mxu0 0.0
    %217 = vmatpush2.msra.mxu0 0.0
    %218 = vmatprep.subr.mxu0 0.0
    %219 = vmatpush2.msra.mxu0 0.0
    %220 = vmatprep.subr.mxu0 0.0
    %221 = vmatpush2.msra.mxu0 0.0
    %222 = vmatprep.subr.mxu0 0.0
    %223 = vmatpush2.msra.mxu0 0.0
    %224 = vmatprep.subr.mxu0 0.0
    %225 = vmatpush2.msra.mxu0 0.0
    %226 = vmatprep.subr.mxu0 0.0
    %227 = vmatpush2.msra.mxu0 0.0
    %228 = vmatprep.subr.mxu0 0.0
    %229 = vmatpush2.msra.mxu0 0.0
    %230 = vmatprep.subr.mxu0 0.0
    %231 = vmatpush2.msra.mxu0 0.0
    %232 = vmatprep.subr.mxu0 0.0
    %233 = vmatpush2.msra.mxu0 0.0
    %234 = vmatprep.subr.mxu0 0.0
    %235 = vmatpush2.msra.mxu0 0.0
    %236 = vmatprep.subr.mxu0 0.0
    %237 = vmatpush2.msra.mxu0 0.0
    %238 = vmatprep.subr.mxu0 0.0
    %239 = vmatpush2.msra.mxu0 0.0
    %240 = vmatprep.subr.mxu0 0.0
    %241 = vmatpush2.msra.mxu0 0.0
    %242 = vmatprep.subr.mxu0 0.0
    %243 = vmatpush2.msra.mxu0 0.0
    %244 = vmatprep.mubr.f32.mxu0 0.0
    %245 = vmatmul.mubr.f32.gmra.mxu0 %v163
    %v246 = vpop.f32.mrf.mxu0
    %v247 = vadd.f32 0.0, %v246
    %v248 = vpop.f32.mrf.mxu0
    %249 = vmatprep.mubr.f32.mxu0 0.0
    %250 = vmatmul.mubr.f32.gmra.mxu0 %v166
    %v251 = vpop.f32.mrf.mxu0
    %v252 = vadd.f32 0.0, %v251
    %v253 = vpop.f32.mrf.mxu0
    %254 = vmatprep.mubr.f32.mxu0 0.0
    %255 = vmatmul.mubr.f32.gmra.mxu0 %v169
    %v256 = vpop.f32.mrf.mxu0
    %v257 = vadd.f32 0.0, %v256
    %v258 = vpop.f32.mrf.mxu0
    %259 = vmatprep.mubr.f32.mxu0 0.0
    %260 = vmatmul.mubr.f32.gmra.mxu0 %v172
    %v261 = vpop.f32.mrf.mxu0
    %v262 = vadd.f32 0.0, %v261
    %v263 = vpop.f32.mrf.mxu0
    %264 = vmatprep.mubr.f32.mxu0 0.0
    %265 = vmatmul.mubr.f32.gmra.mxu0 %v175
    %v266 = vpop.f32.mrf.mxu0
    %v267 = vadd.f32 0.0, %v266
    %v268 = vpop.f32.mrf.mxu0
    %269 = vmatprep.mubr.f32.mxu0 0.0
    %270 = vmatmul.mubr.f32.gmra.mxu0 %v178
    %v271 = vpop.f32.mrf.mxu0
    %v272 = vadd.f32 0.0, %v271
    %v273 = vpop.f32.mrf.mxu0
    %274 = vdwg.mxu0
    %v275 = vtanh.pop %v247
    %v276 = vtanh.pop %v252
    %v277 = vtanh.pop %v257
    %v278 = vtanh.pop %v262
    %v279 = vtanh.pop %v267
    %v280 = vtanh.pop %v272
    %v281 = vmul.f32 %v275, 0.5
    %v282 = vmul.f32 %v276, 0.5
    %v283 = vadd.f32 %v281, 0.5
    %v284 = vadd.f32 %v282, 0.5
    %v285 = vmul.f32 %v279, 0.5
    %v286 = vmul.f32 %v280, 0.5
    %v287 = vadd.f32 %v285, 0.5
    %v288 = vadd.f32 %v286, 0.5
    %v289 = vmul.f32 %v283, %v277
    %v290 = vmul.f32 %v284, %v278
    %v291 = vtanh.pop %v289
    %v292 = vtanh.pop %v290
    %v293 = vmul.f32 %v287, %v291
    %v294 = vmul.f32 %v288, %v292
    %s295 = scalar_lea.vmem %s1, 96
    %v296 = vld [vmem:[%s295] sm:$0xff]
    %v297 = vld [vmem:[%s295 + $0x8] sm:$0xff]
    %v298 = vld [vmem:[%s295 + $0x10] sm:$0xff]
    %v299 = vld [vmem:[%s295 + $0x18] sm:$0xff]
    %v300 = vld [vmem:[%s295 + $0x20] sm:$0xff]
    %v301 = vld [vmem:[%s295 + $0x28] sm:$0xff]
    %v303 = vsel %vm21, %v296, 0
    %v306 = vsel %vm21, %v297, 0
    %v309 = vsel %vm21, %v298, 0
    %v312 = vsel %vm21, %v299, 0
    %v315 = vsel %vm21, %v300, 0
    %v318 = vsel %vm21, %v301, 0
    %320 = vmatprep.subr.mxu0 0.0
    %321 = vmatpush1.msra.mxu0 0.0
    %322 = vmatprep.subr.mxu0 0.0
    %323 = vmatpush1.msra.mxu0 0.0
    %324 = vmatprep.subr.mxu0 0.0
    %325 = vmatpush1.msra.mxu0 0.0
    %326 = vmatprep.subr.mxu0 0.0
    %327 = vmatpush1.msra.mxu0 0.0
    %328 = vmatprep.subr.mxu0 0.0
    %329 = vmatpush1.msra.mxu0 0.0
    %330 = vmatprep.subr.mxu0 0.0
    %331 = vmatpush1.msra.mxu0 0.0
    %332 = vmatprep.subr.mxu0 0.0
    %333 = vmatpush1.msra.mxu0 0.0
    %334 = vmatprep.subr.mxu0 0.0
    %335 = vmatpush1.msra.mxu0 0.0
    %336 = vmatprep.subr.mxu0 0.0
    %337 = vmatpush1.msra.mxu0 0.0
    %338 = vmatprep.subr.mxu0 0.0
    %339 = vmatpush1.msra.mxu0 0.0
    %340 = vmatprep.subr.mxu0 0.0
    %341 = vmatpush1.msra.mxu0 0.0
    %342 = vmatprep.subr.mxu0 0.0
    %343 = vmatpush1.msra.mxu0 0.0
    %344 = vmatprep.subr.mxu0 0.0
    %345 = vmatpush1.msra.mxu0 0.0
    %346 = vmatprep.subr.mxu0 0.0
    %347 = vmatpush1.msra.mxu0 %v14
    %348 = vmatprep.subr.mxu0 0.0
    %349 = vmatpush1.msra.mxu0 %v294
    %350 = vmatprep.subr.mxu0 0.0
    %351 = vmatpush1.msra.mxu0 %v293
    %352 = vmatprep.subr.mxu0 0.0
    %353 = vmatpush2.msra.mxu0 0.0
    %354 = vmatprep.subr.mxu0 0.0
    %355 = vmatpush2.msra.mxu0 0.0
    %356 = vmatprep.subr.mxu0 0.0
    %357 = vmatpush2.msra.mxu0 0.0
    %358 = vmatprep.subr.mxu0 0.0
    %359 = vmatpush2.msra.mxu0 0.0
    %360 = vmatprep.subr.mxu0 0.0
    %361 = vmatpush2.msra.mxu0 0.0
    %362 = vmatprep.subr.mxu0 0.0
    %363 = vmatpush2.msra.mxu0 0.0
    %364 = vmatprep.subr.mxu0 0.0
    %365 = vmatpush2.msra.mxu0 0.0
    %366 = vmatprep.subr.mxu0 0.0
    %367 = vmatpush2.msra.mxu0 0.0
    %368 = vmatprep.subr.mxu0 0.0
    %369 = vmatpush2.msra.mxu0 0.0
    %370 = vmatprep.subr.mxu0 0.0
    %371 = vmatpush2.msra.mxu0 0.0
    %372 = vmatprep.subr.mxu0 0.0
    %373 = vmatpush2.msra.mxu0 0.0
    %374 = vmatprep.subr.mxu0 0.0
    %375 = vmatpush2.msra.mxu0 0.0
    %376 = vmatprep.subr.mxu0 0.0
    %377 = vmatpush2.msra.mxu0 0.0
    %378 = vmatprep.subr.mxu0 0.0
    %379 = vmatpush2.msra.mxu0 0.0
    %380 = vmatprep.subr.mxu0 0.0
    %381 = vmatpush2.msra.mxu0 0.0
    %382 = vmatprep.subr.mxu0 0.0
    %383 = vmatpush2.msra.mxu0 0.0
    %384 = vmatprep.mubr.f32.mxu0 0.0
    %385 = vmatmul.mubr.f32.gmra.mxu0 %v303
    %v386 = vpop.f32.mrf.mxu0
    %v387 = vadd.f32 0.0, %v386
    %v388 = vpop.f32.mrf.mxu0
    %389 = vmatprep.mubr.f32.mxu0 0.0
    %390 = vmatmul.mubr.f32.gmra.mxu0 %v306
    %v391 = vpop.f32.mrf.mxu0
    %v392 = vadd.f32 0.0, %v391
    %v393 = vpop.f32.mrf.mxu0
    %394 = vmatprep.mubr.f32.mxu0 0.0
    %395 = vmatmul.mubr.f32.gmra.mxu0 %v309
    %v396 = vpop.f32.mrf.mxu0
    %v397 = vadd.f32 0.0, %v396
    %v398 = vpop.f32.mrf.mxu0
    %399 = vmatprep.mubr.f32.mxu0 0.0
    %400 = vmatmul.mubr.f32.gmra.mxu0 %v312
    %v401 = vpop.f32.mrf.mxu0
    %v402 = vadd.f32 0.0, %v401
    %v403 = vpop.f32.mrf.mxu0
    %404 = vmatprep.mubr.f32.mxu0 0.0
    %405 = vmatmul.mubr.f32.gmra.mxu0 %v315
    %v406 = vpop.f32.mrf.mxu0
    %v407 = vadd.f32 0.0, %v406
    %v408 = vpop.f32.mrf.mxu0
    %409 = vmatprep.mubr.f32.mxu0 0.0
    %410 = vmatmul.mubr.f32.gmra.mxu0 %v318
    %v411 = vpop.f32.mrf.mxu0
    %v412 = vadd.f32 0.0, %v411
    %v413 = vpop.f32.mrf.mxu0
    %414 = vdwg.mxu0
    %v415 = vtanh.pop %v387
    %v416 = vtanh.pop %v392
    %v417 = vtanh.pop %v397
    %v418 = vtanh.pop %v402
    %v419 = vtanh.pop %v407
    %v420 = vtanh.pop %v412
    %v421 = vmul.f32 %v415, 0.5
    %v422 = vmul.f32 %v416, 0.5
    %v423 = vadd.f32 %v421, 0.5
    %v424 = vadd.f32 %v422, 0.5
    %v425 = vmul.f32 %v419, 0.5
    %v426 = vmul.f32 %v420, 0.5
    %v427 = vadd.f32 %v425, 0.5
    %v428 = vadd.f32 %v426, 0.5
    %v429 = vmul.f32 %v423, %v417
    %v430 = vmul.f32 %v424, %v418
    %v431 = vtanh.pop %v429
    %v432 = vtanh.pop %v430
    %v433 = vmul.f32 %v427, %v431
    %v434 = vmul.f32 %v428, %v432
    %s435 = scalar_lea.vmem %s1, 144
    %v436 = vld [vmem:[%s435] sm:$0xff]
    %v437 = vld [vmem:[%s435 + $0x8] sm:$0xff]
    %v438 = vld [vmem:[%s435 + $0x10] sm:$0xff]
    %v439 = vld [vmem:[%s435 + $0x18] sm:$0xff]
    %v440 = vld [vmem:[%s435 + $0x20] sm:$0xff]
    %v441 = vld [vmem:[%s435 + $0x28] sm:$0xff]
    %v443 = vsel %vm21, %v436, 0
    %v446 = vsel %vm21, %v437, 0
    %v449 = vsel %vm21, %v438, 0
    %v452 = vsel %vm21, %v439, 0
    %v455 = vsel %vm21, %v440, 0
    %v458 = vsel %vm21, %v441, 0
    %460 = vmatprep.subr.mxu0 0.0
    %461 = vmatpush1.msra.mxu0 0.0
    %462 = vmatprep.subr.mxu0 0.0
    %463 = vmatpush1.msra.mxu0 0.0
    %464 = vmatprep.subr.mxu0 0.0
    %465 = vmatpush1.msra.mxu0 0.0
    %466 = vmatprep.subr.mxu0 0.0
    %467 = vmatpush1.msra.mxu0 0.0
    %468 = vmatprep.subr.mxu0 0.0
    %469 = vmatpush1.msra.mxu0 0.0
    %470 = vmatprep.subr.mxu0 0.0
    %471 = vmatpush1.msra.mxu0 0.0
    %472 = vmatprep.subr.mxu0 0.0
    %473 = vmatpush1.msra.mxu0 0.0
    %474 = vmatprep.subr.mxu0 0.0
    %475 = vmatpush1.msra.mxu0 0.0
    %476 = vmatprep.subr.mxu0 0.0
    %477 = vmatpush1.msra.mxu0 0.0
    %478 = vmatprep.subr.mxu0 0.0
    %479 = vmatpush1.msra.mxu0 0.0
    %480 = vmatprep.subr.mxu0 0.0
    %481 = vmatpush1.msra.mxu0 0.0
    %482 = vmatprep.subr.mxu0 0.0
    %483 = vmatpush1.msra.mxu0 0.0
    %484 = vmatprep.subr.mxu0 0.0
    %485 = vmatpush1.msra.mxu0 0.0
    %486 = vmatprep.subr.mxu0 0.0
    %487 = vmatpush1.msra.mxu0 %v14
    %488 = vmatprep.subr.mxu0 0.0
    %489 = vmatpush1.msra.mxu0 %v434
    %490 = vmatprep.subr.mxu0 0.0
    %491 = vmatpush1.msra.mxu0 %v433
    %492 = vmatprep.subr.mxu0 0.0
    %493 = vmatpush2.msra.mxu0 0.0
    %494 = vmatprep.subr.mxu0 0.0
    %495 = vmatpush2.msra.mxu0 0.0
    %496 = vmatprep.subr.mxu0 0.0
    %497 = vmatpush2.msra.mxu0 0.0
    %498 = vmatprep.subr.mxu0 0.0
    %499 = vmatpush2.msra.mxu0 0.0
    %500 = vmatprep.subr.mxu0 0.0
    %501 = vmatpush2.msra.mxu0 0.0
    %502 = vmatprep.subr.mxu0 0.0
    %503 = vmatpush2.msra.mxu0 0.0
    %504 = vmatprep.subr.mxu0 0.0
    %505 = vmatpush2.msra.mxu0 0.0
    %506 = vmatprep.subr.mxu0 0.0
    %507 = vmatpush2.msra.mxu0 0.0
    %508 = vmatprep.subr.mxu0 0.0
    %509 = vmatpush2.msra.mxu0 0.0
    %510 = vmatprep.subr.mxu0 0.0
    %511 = vmatpush2.msra.mxu0 0.0
    %512 = vmatprep.subr.mxu0 0.0
    %513 = vmatpush2.msra.mxu0 0.0
    %514 = vmatprep.subr.mxu0 0.0
    %515 = vmatpush2.msra.mxu0 0.0
    %516 = vmatprep.subr.mxu0 0.0
    %517 = vmatpush2.msra.mxu0 0.0
    %518 = vmatprep.subr.mxu0 0.0
    %519 = vmatpush2.msra.mxu0 0.0
    %520 = vmatprep.subr.mxu0 0.0
    %521 = vmatpush2.msra.mxu0 0.0
    %522 = vmatprep.subr.mxu0 0.0
    %523 = vmatpush2.msra.mxu0 0.0
    %524 = vmatprep.mubr.f32.mxu0 0.0
    %525 = vmatmul.mubr.f32.gmra.mxu0 %v443
    %v526 = vpop.f32.mrf.mxu0
    %v527 = vadd.f32 0.0, %v526
    %v528 = vpop.f32.mrf.mxu0
    %529 = vmatprep.mubr.f32.mxu0 0.0
    %530 = vmatmul.mubr.f32.gmra.mxu0 %v446
    %v531 = vpop.f32.mrf.mxu0
    %v532 = vadd.f32 0.0, %v531
    %v533 = vpop.f32.mrf.mxu0
    %534 = vmatprep.mubr.f32.mxu0 0.0
    %535 = vmatmul.mubr.f32.gmra.mxu0 %v449
    %v536 = vpop.f32.mrf.mxu0
    %v537 = vadd.f32 0.0, %v536
    %v538 = vpop.f32.mrf.mxu0
    %539 = vmatprep.mubr.f32.mxu0 0.0
    %540 = vmatmul.mubr.f32.gmra.mxu0 %v452
    %v541 = vpop.f32.mrf.mxu0
    %v542 = vadd.f32 0.0, %v541
    %v543 = vpop.f32.mrf.mxu0
    %544 = vmatprep.mubr.f32.mxu0 0.0
    %545 = vmatmul.mubr.f32.gmra.mxu0 %v455
    %v546 = vpop.f32.mrf.mxu0
    %v547 = vadd.f32 0.0, %v546
    %v548 = vpop.f32.mrf.mxu0
    %549 = vmatprep.mubr.f32.mxu0 0.0
    %550 = vmatmul.mubr.f32.gmra.mxu0 %v458
    %v551 = vpop.f32.mrf.mxu0
    %v552 = vadd.f32 0.0, %v551
    %v553 = vpop.f32.mrf.mxu0
    %554 = vdwg.mxu0
    %v555 = vtanh.pop %v527
    %v556 = vtanh.pop %v532
    %v557 = vtanh.pop %v537
    %v558 = vtanh.pop %v542
    %v559 = vtanh.pop %v547
    %v560 = vtanh.pop %v552
    %v561 = vmul.f32 %v555, 0.5
    %v562 = vmul.f32 %v556, 0.5
    %v563 = vadd.f32 %v561, 0.5
    %v564 = vadd.f32 %v562, 0.5
    %v565 = vmul.f32 %v559, 0.5
    %v566 = vmul.f32 %v560, 0.5
    %v567 = vadd.f32 %v565, 0.5
    %v568 = vadd.f32 %v566, 0.5
    %v569 = vmul.f32 %v563, %v557
    %v570 = vmul.f32 %v564, %v558
    %v571 = vtanh.pop %v569
    %v572 = vtanh.pop %v570
    %v573 = vmul.f32 %v567, %v571
    %v574 = vmul.f32 %v568, %v572
    %s575 = scalar_lea.vmem %s1, 192
    %v576 = vld [vmem:[%s575] sm:$0xff]
    %v577 = vld [vmem:[%s575 + $0x8] sm:$0xff]
    %v578 = vld [vmem:[%s575 + $0x10] sm:$0xff]
    %v579 = vld [vmem:[%s575 + $0x18] sm:$0xff]
    %v580 = vld [vmem:[%s575 + $0x20] sm:$0xff]
    %v581 = vld [vmem:[%s575 + $0x28] sm:$0xff]
    %v583 = vsel %vm21, %v576, 0
    %v586 = vsel %vm21, %v577, 0
    %v589 = vsel %vm21, %v578, 0
    %v592 = vsel %vm21, %v579, 0
    %v595 = vsel %vm21, %v580, 0
    %v598 = vsel %vm21, %v581, 0
    %600 = vmatprep.subr.mxu0 0.0
    %601 = vmatpush1.msra.mxu0 0.0
    %602 = vmatprep.subr.mxu0 0.0
    %603 = vmatpush1.msra.mxu0 0.0
    %604 = vmatprep.subr.mxu0 0.0
    %605 = vmatpush1.msra.mxu0 0.0
    %606 = vmatprep.subr.mxu0 0.0
    %607 = vmatpush1.msra.mxu0 0.0
    %608 = vmatprep.subr.mxu0 0.0
    %609 = vmatpush1.msra.mxu0 0.0
    %610 = vmatprep.subr.mxu0 0.0
    %611 = vmatpush1.msra.mxu0 0.0
    %612 = vmatprep.subr.mxu0 0.0
    %613 = vmatpush1.msra.mxu0 0.0
    %614 = vmatprep.subr.mxu0 0.0
    %615 = vmatpush1.msra.mxu0 0.0
    %616 = vmatprep.subr.mxu0 0.0
    %617 = vmatpush1.msra.mxu0 0.0
    %618 = vmatprep.subr.mxu0 0.0
    %619 = vmatpush1.msra.mxu0 0.0
    %620 = vmatprep.subr.mxu0 0.0
    %621 = vmatpush1.msra.mxu0 0.0
    %622 = vmatprep.subr.mxu0 0.0
    %623 = vmatpush1.msra.mxu0 0.0
    %624 = vmatprep.subr.mxu0 0.0
    %625 = vmatpush1.msra.mxu0 0.0
    %626 = vmatprep.subr.mxu0 0.0
    %627 = vmatpush1.msra.mxu0 %v14
    %628 = vmatprep.subr.mxu0 0.0
    %629 = vmatpush1.msra.mxu0 %v574
    %630 = vmatprep.subr.mxu0 0.0
    %631 = vmatpush1.msra.mxu0 %v573
    %632 = vmatprep.subr.mxu0 0.0
    %633 = vmatpush2.msra.mxu0 0.0
    %634 = vmatprep.subr.mxu0 0.0
    %635 = vmatpush2.msra.mxu0 0.0
    %636 = vmatprep.subr.mxu0 0.0
    %637 = vmatpush2.msra.mxu0 0.0
    %638 = vmatprep.subr.mxu0 0.0
    %639 = vmatpush2.msra.mxu0 0.0
    %640 = vmatprep.subr.mxu0 0.0
    %641 = vmatpush2.msra.mxu0 0.0
    %642 = vmatprep.subr.mxu0 0.0
    %643 = vmatpush2.msra.mxu0 0.0
    %644 = vmatprep.subr.mxu0 0.0
    %645 = vmatpush2.msra.mxu0 0.0
    %646 = vmatprep.subr.mxu0 0.0
    %647 = vmatpush2.msra.mxu0 0.0
    %648 = vmatprep.subr.mxu0 0.0
    %649 = vmatpush2.msra.mxu0 0.0
    %650 = vmatprep.subr.mxu0 0.0
    %651 = vmatpush2.msra.mxu0 0.0
    %652 = vmatprep.subr.mxu0 0.0
    %653 = vmatpush2.msra.mxu0 0.0
    %654 = vmatprep.subr.mxu0 0.0
    %655 = vmatpush2.msra.mxu0 0.0
    %656 = vmatprep.subr.mxu0 0.0
    %657 = vmatpush2.msra.mxu0 0.0
    %658 = vmatprep.subr.mxu0 0.0
    %659 = vmatpush2.msra.mxu0 0.0
    %660 = vmatprep.subr.mxu0 0.0
    %661 = vmatpush2.msra.mxu0 0.0
    %662 = vmatprep.subr.mxu0 0.0
    %663 = vmatpush2.msra.mxu0 0.0
    %664 = vmatprep.mubr.f32.mxu0 0.0
    %665 = vmatmul.mubr.f32.gmra.mxu0 %v583
    %v666 = vpop.f32.mrf.mxu0
    %v667 = vadd.f32 0.0, %v666
    %v668 = vpop.f32.mrf.mxu0
    %669 = vmatprep.mubr.f32.mxu0 0.0
    %670 = vmatmul.mubr.f32.gmra.mxu0 %v586
    %v671 = vpop.f32.mrf.mxu0
    %v672 = vadd.f32 0.0, %v671
    %v673 = vpop.f32.mrf.mxu0
    %674 = vmatprep.mubr.f32.mxu0 0.0
    %675 = vmatmul.mubr.f32.gmra.mxu0 %v589
    %v676 = vpop.f32.mrf.mxu0
    %v677 = vadd.f32 0.0, %v676
    %v678 = vpop.f32.mrf.mxu0
    %679 = vmatprep.mubr.f32.mxu0 0.0
    %680 = vmatmul.mubr.f32.gmra.mxu0 %v592
    %v681 = vpop.f32.mrf.mxu0
    %v682 = vadd.f32 0.0, %v681
    %v683 = vpop.f32.mrf.mxu0
    %684 = vmatprep.mubr.f32.mxu0 0.0
    %685 = vmatmul.mubr.f32.gmra.mxu0 %v595
    %v686 = vpop.f32.mrf.mxu0
    %v687 = vadd.f32 0.0, %v686
    %v688 = vpop.f32.mrf.mxu0
    %689 = vmatprep.mubr.f32.mxu0 0.0
    %690 = vmatmul.mubr.f32.gmra.mxu0 %v598
    %v691 = vpop.f32.mrf.mxu0
    %v692 = vadd.f32 0.0, %v691
    %v693 = vpop.f32.mrf.mxu0
    %694 = vdwg.mxu0
    %v695 = vtanh.pop %v667
    %v696 = vtanh.pop %v672
    %v697 = vtanh.pop %v677
    %v698 = vtanh.pop %v682
    %v699 = vtanh.pop %v687
    %v700 = vtanh.pop %v692
    %v701 = vmul.f32 %v695, 0.5
    %v702 = vmul.f32 %v696, 0.5
    %v703 = vadd.f32 %v701, 0.5
    %v704 = vadd.f32 %v702, 0.5
    %v705 = vmul.f32 %v699, 0.5
    %v706 = vmul.f32 %v700, 0.5
    %v707 = vadd.f32 %v705, 0.5
    %v708 = vadd.f32 %v706, 0.5
    %v709 = vmul.f32 %v703, %v697
    %v710 = vmul.f32 %v704, %v698
    %v711 = vtanh.pop %v709
    %v712 = vtanh.pop %v710
    %v713 = vmul.f32 %v707, %v711
    %v714 = vmul.f32 %v708, %v712
    %s715 = scalar_lea.vmem %s1, 240
    %v716 = vld [vmem:[%s715] sm:$0xff]
    %v717 = vld [vmem:[%s715 + $0x8] sm:$0xff]
    %v718 = vld [vmem:[%s715 + $0x10] sm:$0xff]
    %v719 = vld [vmem:[%s715 + $0x18] sm:$0xff]
    %v720 = vld [vmem:[%s715 + $0x20] sm:$0xff]
    %v721 = vld [vmem:[%s715 + $0x28] sm:$0xff]
    %v723 = vsel %vm21, %v716, 0
    %v726 = vsel %vm21, %v717, 0
    %v729 = vsel %vm21, %v718, 0
    %v732 = vsel %vm21, %v719, 0
    %v735 = vsel %vm21, %v720, 0
    %v738 = vsel %vm21, %v721, 0
    %740 = vmatprep.subr.mxu0 0.0
    %741 = vmatpush1.msra.mxu0 0.0
    %742 = vmatprep.subr.mxu0 0.0
    %743 = vmatpush1.msra.mxu0 0.0
    %744 = vmatprep.subr.mxu0 0.0
    %745 = vmatpush1.msra.mxu0 0.0
    %746 = vmatprep.subr.mxu0 0.0
    %747 = vmatpush1.msra.mxu0 0.0
    %748 = vmatprep.subr.mxu0 0.0
    %749 = vmatpush1.msra.mxu0 0.0
    %750 = vmatprep.subr.mxu0 0.0
    %751 = vmatpush1.msra.mxu0 0.0
    %752 = vmatprep.subr.mxu0 0.0
    %753 = vmatpush1.msra.mxu0 0.0
    %754 = vmatprep.subr.mxu0 0.0
    %755 = vmatpush1.msra.mxu0 0.0
    %756 = vmatprep.subr.mxu0 0.0
    %757 = vmatpush1.msra.mxu0 0.0
    %758 = vmatprep.subr.mxu0 0.0
    %759 = vmatpush1.msra.mxu0 0.0
    %760 = vmatprep.subr.mxu0 0.0
    %761 = vmatpush1.msra.mxu0 0.0
    %762 = vmatprep.subr.mxu0 0.0
    %763 = vmatpush1.msra.mxu0 0.0
    %764 = vmatprep.subr.mxu0 0.0
    %765 = vmatpush1.msra.mxu0 0.0
    %766 = vmatprep.subr.mxu0 0.0
    %767 = vmatpush1.msra.mxu0 %v14
    %768 = vmatprep.subr.mxu0 0.0
    %769 = vmatpush1.msra.mxu0 %v714
    %770 = vmatprep.subr.mxu0 0.0
    %771 = vmatpush1.msra.mxu0 %v713
    %772 = vmatprep.subr.mxu0 0.0
    %773 = vmatpush2.msra.mxu0 0.0
    %774 = vmatprep.subr.mxu0 0.0
    %775 = vmatpush2.msra.mxu0 0.0
    %776 = vmatprep.subr.mxu0 0.0
    %777 = vmatpush2.msra.mxu0 0.0
    %778 = vmatprep.subr.mxu0 0.0
    %779 = vmatpush2.msra.mxu0 0.0
    %780 = vmatprep.subr.mxu0 0.0
    %781 = vmatpush2.msra.mxu0 0.0
    %782 = vmatprep.subr.mxu0 0.0
    %783 = vmatpush2.msra.mxu0 0.0
    %784 = vmatprep.subr.mxu0 0.0
    %785 = vmatpush2.msra.mxu0 0.0
    %786 = vmatprep.subr.mxu0 0.0
    %787 = vmatpush2.msra.mxu0 0.0
    %788 = vmatprep.subr.mxu0 0.0
    %789 = vmatpush2.msra.mxu0 0.0
    %790 = vmatprep.subr.mxu0 0.0
    %791 = vmatpush2.msra.mxu0 0.0
    %792 = vmatprep.subr.mxu0 0.0
    %793 = vmatpush2.msra.mxu0 0.0
    %794 = vmatprep.subr.mxu0 0.0
    %795 = vmatpush2.msra.mxu0 0.0
    %796 = vmatprep.subr.mxu0 0.0
    %797 = vmatpush2.msra.mxu0 0.0
    %798 = vmatprep.subr.mxu0 0.0
    %799 = vmatpush2.msra.mxu0 0.0
    %800 = vmatprep.subr.mxu0 0.0
    %801 = vmatpush2.msra.mxu0 0.0
    %802 = vmatprep.subr.mxu0 0.0
    %803 = vmatpush2.msra.mxu0 0.0
    %804 = vmatprep.mubr.f32.mxu0 0.0
    %805 = vmatmul.mubr.f32.gmra.mxu0 %v723
    %v806 = vpop.f32.mrf.mxu0
    %v807 = vadd.f32 0.0, %v806
    %v808 = vpop.f32.mrf.mxu0
    %809 = vmatprep.mubr.f32.mxu0 0.0
    %810 = vmatmul.mubr.f32.gmra.mxu0 %v726
    %v811 = vpop.f32.mrf.mxu0
    %v812 = vadd.f32 0.0, %v811
    %v813 = vpop.f32.mrf.mxu0
    %814 = vmatprep.mubr.f32.mxu0 0.0
    %815 = vmatmul.mubr.f32.gmra.mxu0 %v729
    %v816 = vpop.f32.mrf.mxu0
    %v817 = vadd.f32 0.0, %v816
    %v818 = vpop.f32.mrf.mxu0
    %819 = vmatprep.mubr.f32.mxu0 0.0
    %820 = vmatmul.mubr.f32.gmra.mxu0 %v732
    %v821 = vpop.f32.mrf.mxu0
    %v822 = vadd.f32 0.0, %v821
    %v823 = vpop.f32.mrf.mxu0
    %824 = vmatprep.mubr.f32.mxu0 0.0
    %825 = vmatmul.mubr.f32.gmra.mxu0 %v735
    %v826 = vpop.f32.mrf.mxu0
    %v827 = vadd.f32 0.0, %v826
    %v828 = vpop.f32.mrf.mxu0
    %829 = vmatprep.mubr.f32.mxu0 0.0
    %830 = vmatmul.mubr.f32.gmra.mxu0 %v738
    %v831 = vpop.f32.mrf.mxu0
    %v832 = vadd.f32 0.0, %v831
    %v833 = vpop.f32.mrf.mxu0
    %834 = vdwg.mxu0
    %v835 = vtanh.pop %v807
    %v836 = vtanh.pop %v812
    %v837 = vtanh.pop %v817
    %v838 = vtanh.pop %v822
    %v839 = vtanh.pop %v827
    %v840 = vtanh.pop %v832
    %v841 = vmul.f32 %v835, 0.5
    %v842 = vmul.f32 %v836, 0.5
    %v843 = vadd.f32 %v841, 0.5
    %v844 = vadd.f32 %v842, 0.5
    %v845 = vmul.f32 %v839, 0.5
    %v846 = vmul.f32 %v840, 0.5
    %v847 = vadd.f32 %v845, 0.5
    %v848 = vadd.f32 %v846, 0.5
    %v849 = vmul.f32 %v843, %v837
    %v850 = vmul.f32 %v844, %v838
    %v851 = vtanh.pop %v849
    %v852 = vtanh.pop %v850
    %v853 = vmul.f32 %v847, %v851
    %v854 = vmul.f32 %v848, %v852
    %s855 = scalar_lea.vmem %s1, 288
    %v856 = vld [vmem:[%s855] sm:$0xff]
    %v857 = vld [vmem:[%s855 + $0x8] sm:$0xff]
    %v858 = vld [vmem:[%s855 + $0x10] sm:$0xff]
    %v859 = vld [vmem:[%s855 + $0x18] sm:$0xff]
    %v860 = vld [vmem:[%s855 + $0x20] sm:$0xff]
    %v861 = vld [vmem:[%s855 + $0x28] sm:$0xff]
    %v863 = vsel %vm21, %v856, 0
    %v866 = vsel %vm21, %v857, 0
    %v869 = vsel %vm21, %v858, 0
    %v872 = vsel %vm21, %v859, 0
    %v875 = vsel %vm21, %v860, 0
    %v878 = vsel %vm21, %v861, 0
    %880 = vmatprep.subr.mxu0 0.0
    %881 = vmatpush1.msra.mxu0 0.0
    %882 = vmatprep.subr.mxu0 0.0
    %883 = vmatpush1.msra.mxu0 0.0
    %884 = vmatprep.subr.mxu0 0.0
    %885 = vmatpush1.msra.mxu0 0.0
    %886 = vmatprep.subr.mxu0 0.0
    %887 = vmatpush1.msra.mxu0 0.0
    %888 = vmatprep.subr.mxu0 0.0
    %889 = vmatpush1.msra.mxu0 0.0
    %890 = vmatprep.subr.mxu0 0.0
    %891 = vmatpush1.msra.mxu0 0.0
    %892 = vmatprep.subr.mxu0 0.0
    %893 = vmatpush1.msra.mxu0 0.0
    %894 = vmatprep.subr.mxu0 0.0
    %895 = vmatpush1.msra.mxu0 0.0
    %896 = vmatprep.subr.mxu0 0.0
    %897 = vmatpush1.msra.mxu0 0.0
    %898 = vmatprep.subr.mxu0 0.0
    %899 = vmatpush1.msra.mxu0 0.0
    %900 = vmatprep.subr.mxu0 0.0
    %901 = vmatpush1.msra.mxu0 0.0
    %902 = vmatprep.subr.mxu0 0.0
    %903 = vmatpush1.msra.mxu0 0.0
    %904 = vmatprep.subr.mxu0 0.0
    %905 = vmatpush1.msra.mxu0 0.0
    %906 = vmatprep.subr.mxu0 0.0
    %907 = vmatpush1.msra.mxu0 %v14
    %908 = vmatprep.subr.mxu0 0.0
    %909 = vmatpush1.msra.mxu0 %v854
    %910 = vmatprep.subr.mxu0 0.0
    %911 = vmatpush1.msra.mxu0 %v853
    %912 = vmatprep.subr.mxu0 0.0
    %913 = vmatpush2.msra.mxu0 0.0
    %914 = vmatprep.subr.mxu0 0.0
    %915 = vmatpush2.msra.mxu0 0.0
    %916 = vmatprep.subr.mxu0 0.0
    %917 = vmatpush2.msra.mxu0 0.0
    %918 = vmatprep.subr.mxu0 0.0
    %919 = vmatpush2.msra.mxu0 0.0
    %920 = vmatprep.subr.mxu0 0.0
    %921 = vmatpush2.msra.mxu0 0.0
    %922 = vmatprep.subr.mxu0 0.0
    %923 = vmatpush2.msra.mxu0 0.0
    %924 = vmatprep.subr.mxu0 0.0
    %925 = vmatpush2.msra.mxu0 0.0
    %926 = vmatprep.subr.mxu0 0.0
    %927 = vmatpush2.msra.mxu0 0.0
    %928 = vmatprep.subr.mxu0 0.0
    %929 = vmatpush2.msra.mxu0 0.0
    %930 = vmatprep.subr.mxu0 0.0
    %931 = vmatpush2.msra.mxu0 0.0
    %932 = vmatprep.subr.mxu0 0.0
    %933 = vmatpush2.msra.mxu0 0.0
    %934 = vmatprep.subr.mxu0 0.0
    %935 = vmatpush2.msra.mxu0 0.0
    %936 = vmatprep.subr.mxu0 0.0
    %937 = vmatpush2.msra.mxu0 0.0
    %938 = vmatprep.subr.mxu0 0.0
    %939 = vmatpush2.msra.mxu0 0.0
    %940 = vmatprep.subr.mxu0 0.0
    %941 = vmatpush2.msra.mxu0 0.0
    %942 = vmatprep.subr.mxu0 0.0
    %943 = vmatpush2.msra.mxu0 0.0
    %944 = vmatprep.mubr.f32.mxu0 0.0
    %945 = vmatmul.mubr.f32.gmra.mxu0 %v863
    %v946 = vpop.f32.mrf.mxu0
    %v947 = vadd.f32 0.0, %v946
    %v948 = vpop.f32.mrf.mxu0
    %949 = vmatprep.mubr.f32.mxu0 0.0
    %950 = vmatmul.mubr.f32.gmra.mxu0 %v866
    %v951 = vpop.f32.mrf.mxu0
    %v952 = vadd.f32 0.0, %v951
    %v953 = vpop.f32.mrf.mxu0
    %954 = vmatprep.mubr.f32.mxu0 0.0
    %955 = vmatmul.mubr.f32.gmra.mxu0 %v869
    %v956 = vpop.f32.mrf.mxu0
    %v957 = vadd.f32 0.0, %v956
    %v958 = vpop.f32.mrf.mxu0
    %959 = vmatprep.mubr.f32.mxu0 0.0
    %960 = vmatmul.mubr.f32.gmra.mxu0 %v872
    %v961 = vpop.f32.mrf.mxu0
    %v962 = vadd.f32 0.0, %v961
    %v963 = vpop.f32.mrf.mxu0
    %964 = vmatprep.mubr.f32.mxu0 0.0
    %965 = vmatmul.mubr.f32.gmra.mxu0 %v875
    %v966 = vpop.f32.mrf.mxu0
    %v967 = vadd.f32 0.0, %v966
    %v968 = vpop.f32.mrf.mxu0
    %969 = vmatprep.mubr.f32.mxu0 0.0
    %970 = vmatmul.mubr.f32.gmra.mxu0 %v878
    %v971 = vpop.f32.mrf.mxu0
    %v972 = vadd.f32 0.0, %v971
    %v973 = vpop.f32.mrf.mxu0
    %974 = vdwg.mxu0
    %v975 = vtanh.pop %v947
    %v976 = vtanh.pop %v952
    %v977 = vtanh.pop %v957
    %v978 = vtanh.pop %v962
    %v979 = vtanh.pop %v967
    %v980 = vtanh.pop %v972
    %v981 = vmul.f32 %v975, 0.5
    %v982 = vmul.f32 %v976, 0.5
    %v983 = vadd.f32 %v981, 0.5
    %v984 = vadd.f32 %v982, 0.5
    %v985 = vmul.f32 %v979, 0.5
    %v986 = vmul.f32 %v980, 0.5
    %v987 = vadd.f32 %v985, 0.5
    %v988 = vadd.f32 %v986, 0.5
    %v989 = vmul.f32 %v983, %v977
    %v990 = vmul.f32 %v984, %v978
    %v991 = vtanh.pop %v989
    %v992 = vtanh.pop %v990
    %v993 = vmul.f32 %v987, %v991
    %v994 = vmul.f32 %v988, %v992
    %s995 = scalar_lea.vmem %s1, 336
    %v996 = vld [vmem:[%s995] sm:$0xff]
    %v997 = vld [vmem:[%s995 + $0x8] sm:$0xff]
    %v998 = vld [vmem:[%s995 + $0x10] sm:$0xff]
    %v999 = vld [vmem:[%s995 + $0x18] sm:$0xff]
    %v1000 = vld [vmem:[%s995 + $0x20] sm:$0xff]
    %v1001 = vld [vmem:[%s995 + $0x28] sm:$0xff]
    %v1003 = vsel %vm21, %v996, 0
    %v1006 = vsel %vm21, %v997, 0
    %v1009 = vsel %vm21, %v998, 0
    %v1012 = vsel %vm21, %v999, 0
    %v1015 = vsel %vm21, %v1000, 0
    %v1018 = vsel %vm21, %v1001, 0
    %1020 = vmatprep.subr.mxu0 0.0
    %1021 = vmatpush1.msra.mxu0 0.0
    %1022 = vmatprep.subr.mxu0 0.0
    %1023 = vmatpush1.msra.mxu0 0.0
    %1024 = vmatprep.subr.mxu0 0.0
    %1025 = vmatpush1.msra.mxu0 0.0
    %1026 = vmatprep.subr.mxu0 0.0
    %1027 = vmatpush1.msra.mxu0 0.0
    %1028 = vmatprep.subr.mxu0 0.0
    %1029 = vmatpush1.msra.mxu0 0.0
    %1030 = vmatprep.subr.mxu0 0.0
    %1031 = vmatpush1.msra.mxu0 0.0
    %1032 = vmatprep.subr.mxu0 0.0
    %1033 = vmatpush1.msra.mxu0 0.0
    %1034 = vmatprep.subr.mxu0 0.0
    %1035 = vmatpush1.msra.mxu0 0.0
    %1036 = vmatprep.subr.mxu0 0.0
    %1037 = vmatpush1.msra.mxu0 0.0
    %1038 = vmatprep.subr.mxu0 0.0
    %1039 = vmatpush1.msra.mxu0 0.0
    %1040 = vmatprep.subr.mxu0 0.0
    %1041 = vmatpush1.msra.mxu0 0.0
    %1042 = vmatprep.subr.mxu0 0.0
    %1043 = vmatpush1.msra.mxu0 0.0
    %1044 = vmatprep.subr.mxu0 0.0
    %1045 = vmatpush1.msra.mxu0 0.0
    %1046 = vmatprep.subr.mxu0 0.0
    %1047 = vmatpush1.msra.mxu0 %v14
    %1048 = vmatprep.subr.mxu0 0.0
    %1049 = vmatpush1.msra.mxu0 %v994
    %1050 = vmatprep.subr.mxu0 0.0
    %1051 = vmatpush1.msra.mxu0 %v993
    %1052 = vmatprep.subr.mxu0 0.0
    %1053 = vmatpush2.msra.mxu0 0.0
    %1054 = vmatprep.subr.mxu0 0.0
    %1055 = vmatpush2.msra.mxu0 0.0
    %1056 = vmatprep.subr.mxu0 0.0
    %1057 = vmatpush2.msra.mxu0 0.0
    %1058 = vmatprep.subr.mxu0 0.0
    %1059 = vmatpush2.msra.mxu0 0.0
    %1060 = vmatprep.subr.mxu0 0.0
    %1061 = vmatpush2.msra.mxu0 0.0
    %1062 = vmatprep.subr.mxu0 0.0
    %1063 = vmatpush2.msra.mxu0 0.0
    %1064 = vmatprep.subr.mxu0 0.0
    %1065 = vmatpush2.msra.mxu0 0.0
    %1066 = vmatprep.subr.mxu0 0.0
    %1067 = vmatpush2.msra.mxu0 0.0
    %1068 = vmatprep.subr.mxu0 0.0
    %1069 = vmatpush2.msra.mxu0 0.0
    %1070 = vmatprep.subr.mxu0 0.0
    %1071 = vmatpush2.msra.mxu0 0.0
    %1072 = vmatprep.subr.mxu0 0.0
    %1073 = vmatpush2.msra.mxu0 0.0
    %1074 = vmatprep.subr.mxu0 0.0
    %1075 = vmatpush2.msra.mxu0 0.0
    %1076 = vmatprep.subr.mxu0 0.0
    %1077 = vmatpush2.msra.mxu0 0.0
    %1078 = vmatprep.subr.mxu0 0.0
    %1079 = vmatpush2.msra.mxu0 0.0
    %1080 = vmatprep.subr.mxu0 0.0
    %1081 = vmatpush2.msra.mxu0 0.0
    %1082 = vmatprep.subr.mxu0 0.0
    %1083 = vmatpush2.msra.mxu0 0.0
    %1084 = vmatprep.mubr.f32.mxu0 0.0
    %1085 = vmatmul.mubr.f32.gmra.mxu0 %v1003
    %v1086 = vpop.f32.mrf.mxu0
    %v1087 = vadd.f32 0.0, %v1086
    %v1088 = vpop.f32.mrf.mxu0
    %1089 = vmatprep.mubr.f32.mxu0 0.0
    %1090 = vmatmul.mubr.f32.gmra.mxu0 %v1006
    %v1091 = vpop.f32.mrf.mxu0
    %v1092 = vadd.f32 0.0, %v1091
    %v1093 = vpop.f32.mrf.mxu0
    %1094 = vmatprep.mubr.f32.mxu0 0.0
    %1095 = vmatmul.mubr.f32.gmra.mxu0 %v1009
    %v1096 = vpop.f32.mrf.mxu0
    %v1097 = vadd.f32 0.0, %v1096
    %v1098 = vpop.f32.mrf.mxu0
    %1099 = vmatprep.mubr.f32.mxu0 0.0
    %1100 = vmatmul.mubr.f32.gmra.mxu0 %v1012
    %v1101 = vpop.f32.mrf.mxu0
    %v1102 = vadd.f32 0.0, %v1101
    %v1103 = vpop.f32.mrf.mxu0
    %1104 = vmatprep.mubr.f32.mxu0 0.0
    %1105 = vmatmul.mubr.f32.gmra.mxu0 %v1015
    %v1106 = vpop.f32.mrf.mxu0
    %v1107 = vadd.f32 0.0, %v1106
    %v1108 = vpop.f32.mrf.mxu0
    %1109 = vmatprep.mubr.f32.mxu0 0.0
    %1110 = vmatmul.mubr.f32.gmra.mxu0 %v1018
    %v1111 = vpop.f32.mrf.mxu0
    %v1112 = vadd.f32 0.0, %v1111
    %v1113 = vpop.f32.mrf.mxu0
    %1114 = vdwg.mxu0
    %v1115 = vtanh.pop %v1087
    %v1116 = vtanh.pop %v1092
    %v1117 = vtanh.pop %v1097
    %v1118 = vtanh.pop %v1102
    %v1119 = vtanh.pop %v1107
    %v1120 = vtanh.pop %v1112
    %v1121 = vmul.f32 %v1115, 0.5
    %v1122 = vmul.f32 %v1116, 0.5
    %v1123 = vadd.f32 %v1121, 0.5
    %v1124 = vadd.f32 %v1122, 0.5
    %v1125 = vmul.f32 %v1119, 0.5
    %v1126 = vmul.f32 %v1120, 0.5
    %v1127 = vadd.f32 %v1125, 0.5
    %v1128 = vadd.f32 %v1126, 0.5
    %v1129 = vmul.f32 %v1123, %v1117
    %v1130 = vmul.f32 %v1124, %v1118
    %v1131 = vtanh.pop %v1129
    %v1132 = vtanh.pop %v1130
    %v1133 = vmul.f32 %v1127, %v1131
    %v1134 = vmul.f32 %v1128, %v1132
    %s1135 = scalar_lea.vmem %s1, 384
    %v1136 = vld [vmem:[%s1135] sm:$0xff]
    %v1137 = vld [vmem:[%s1135 + $0x8] sm:$0xff]
    %v1138 = vld [vmem:[%s1135 + $0x10] sm:$0xff]
    %v1139 = vld [vmem:[%s1135 + $0x18] sm:$0xff]
    %v1140 = vld [vmem:[%s1135 + $0x20] sm:$0xff]
    %v1141 = vld [vmem:[%s1135 + $0x28] sm:$0xff]
    %v1143 = vsel %vm21, %v1136, 0
    %v1146 = vsel %vm21, %v1137, 0
    %v1149 = vsel %vm21, %v1138, 0
    %v1152 = vsel %vm21, %v1139, 0
    %v1155 = vsel %vm21, %v1140, 0
    %v1158 = vsel %vm21, %v1141, 0
    %1160 = vmatprep.subr.mxu0 0.0
    %1161 = vmatpush1.msra.mxu0 0.0
    %1162 = vmatprep.subr.mxu0 0.0
    %1163 = vmatpush1.msra.mxu0 0.0
    %1164 = vmatprep.subr.mxu0 0.0
    %1165 = vmatpush1.msra.mxu0 0.0
    %1166 = vmatprep.subr.mxu0 0.0
    %1167 = vmatpush1.msra.mxu0 0.0
    %1168 = vmatprep.subr.mxu0 0.0
    %1169 = vmatpush1.msra.mxu0 0.0
    %1170 = vmatprep.subr.mxu0 0.0
    %1171 = vmatpush1.msra.mxu0 0.0
    %1172 = vmatprep.subr.mxu0 0.0
    %1173 = vmatpush1.msra.mxu0 0.0
    %1174 = vmatprep.subr.mxu0 0.0
    %1175 = vmatpush1.msra.mxu0 0.0
    %1176 = vmatprep.subr.mxu0 0.0
    %1177 = vmatpush1.msra.mxu0 0.0
    %1178 = vmatprep.subr.mxu0 0.0
    %1179 = vmatpush1.msra.mxu0 0.0
    %1180 = vmatprep.subr.mxu0 0.0
    %1181 = vmatpush1.msra.mxu0 0.0
    %1182 = vmatprep.subr.mxu0 0.0
    %1183 = vmatpush1.msra.mxu0 0.0
    %1184 = vmatprep.subr.mxu0 0.0
    %1185 = vmatpush1.msra.mxu0 0.0
    %1186 = vmatprep.subr.mxu0 0.0
    %1187 = vmatpush1.msra.mxu0 %v14
    %1188 = vmatprep.subr.mxu0 0.0
    %1189 = vmatpush1.msra.mxu0 %v1134
    %1190 = vmatprep.subr.mxu0 0.0
    %1191 = vmatpush1.msra.mxu0 %v1133
    %1192 = vmatprep.subr.mxu0 0.0
    %1193 = vmatpush2.msra.mxu0 0.0
    %1194 = vmatprep.subr.mxu0 0.0
    %1195 = vmatpush2.msra.mxu0 0.0
    %1196 = vmatprep.subr.mxu0 0.0
    %1197 = vmatpush2.msra.mxu0 0.0
    %1198 = vmatprep.subr.mxu0 0.0
    %1199 = vmatpush2.msra.mxu0 0.0
    %1200 = vmatprep.subr.mxu0 0.0
    %1201 = vmatpush2.msra.mxu0 0.0
    %1202 = vmatprep.subr.mxu0 0.0
    %1203 = vmatpush2.msra.mxu0 0.0
    %1204 = vmatprep.subr.mxu0 0.0
    %1205 = vmatpush2.msra.mxu0 0.0
    %1206 = vmatprep.subr.mxu0 0.0
    %1207 = vmatpush2.msra.mxu0 0.0
    %1208 = vmatprep.subr.mxu0 0.0
    %1209 = vmatpush2.msra.mxu0 0.0
    %1210 = vmatprep.subr.mxu0 0.0
    %1211 = vmatpush2.msra.mxu0 0.0
    %1212 = vmatprep.subr.mxu0 0.0
    %1213 = vmatpush2.msra.mxu0 0.0
    %1214 = vmatprep.subr.mxu0 0.0
    %1215 = vmatpush2.msra.mxu0 0.0
    %1216 = vmatprep.subr.mxu0 0.0
    %1217 = vmatpush2.msra.mxu0 0.0
    %1218 = vmatprep.subr.mxu0 0.0
    %1219 = vmatpush2.msra.mxu0 0.0
    %1220 = vmatprep.subr.mxu0 0.0
    %1221 = vmatpush2.msra.mxu0 0.0
    %1222 = vmatprep.subr.mxu0 0.0
    %1223 = vmatpush2.msra.mxu0 0.0
    %1224 = vmatprep.mubr.f32.mxu0 0.0
    %1225 = vmatmul.mubr.f32.gmra.mxu0 %v1143
    %v1226 = vpop.f32.mrf.mxu0
    %v1227 = vadd.f32 0.0, %v1226
    %v1228 = vpop.f32.mrf.mxu0
    %1229 = vmatprep.mubr.f32.mxu0 0.0
    %1230 = vmatmul.mubr.f32.gmra.mxu0 %v1146
    %v1231 = vpop.f32.mrf.mxu0
    %v1232 = vadd.f32 0.0, %v1231
    %v1233 = vpop.f32.mrf.mxu0
    %1234 = vmatprep.mubr.f32.mxu0 0.0
    %1235 = vmatmul.mubr.f32.gmra.mxu0 %v1149
    %v1236 = vpop.f32.mrf.mxu0
    %v1237 = vadd.f32 0.0, %v1236
    %v1238 = vpop.f32.mrf.mxu0
    %1239 = vmatprep.mubr.f32.mxu0 0.0
    %1240 = vmatmul.mubr.f32.gmra.mxu0 %v1152
    %v1241 = vpop.f32.mrf.mxu0
    %v1242 = vadd.f32 0.0, %v1241
    %v1243 = vpop.f32.mrf.mxu0
    %1244 = vmatprep.mubr.f32.mxu0 0.0
    %1245 = vmatmul.mubr.f32.gmra.mxu0 %v1155
    %v1246 = vpop.f32.mrf.mxu0
    %v1247 = vadd.f32 0.0, %v1246
    %v1248 = vpop.f32.mrf.mxu0
    %1249 = vmatprep.mubr.f32.mxu0 0.0
    %1250 = vmatmul.mubr.f32.gmra.mxu0 %v1158
    %v1251 = vpop.f32.mrf.mxu0
    %v1252 = vadd.f32 0.0, %v1251
    %v1253 = vpop.f32.mrf.mxu0
    %1254 = vdwg.mxu0
    %v1255 = vtanh.pop %v1227
    %v1256 = vtanh.pop %v1232
    %v1257 = vtanh.pop %v1237
    %v1258 = vtanh.pop %v1242
    %v1259 = vtanh.pop %v1247
    %v1260 = vtanh.pop %v1252
    %v1261 = vmul.f32 %v1255, 0.5
    %v1262 = vmul.f32 %v1256, 0.5
    %v1263 = vadd.f32 %v1261, 0.5
    %v1264 = vadd.f32 %v1262, 0.5
    %v1265 = vmul.f32 %v1259, 0.5
    %v1266 = vmul.f32 %v1260, 0.5
    %v1267 = vadd.f32 %v1265, 0.5
    %v1268 = vadd.f32 %v1266, 0.5
    %v1269 = vmul.f32 %v1263, %v1257
    %v1270 = vmul.f32 %v1264, %v1258
    %v1271 = vtanh.pop %v1269
    %v1272 = vtanh.pop %v1270
    %v1273 = vmul.f32 %v1267, %v1271
    %v1274 = vmul.f32 %v1268, %v1272
    %s1275 = scalar_lea.vmem %s1, 432
    %v1276 = vld [vmem:[%s1275] sm:$0xff]
    %v1277 = vld [vmem:[%s1275 + $0x8] sm:$0xff]
    %v1278 = vld [vmem:[%s1275 + $0x10] sm:$0xff]
    %v1279 = vld [vmem:[%s1275 + $0x18] sm:$0xff]
    %v1280 = vld [vmem:[%s1275 + $0x20] sm:$0xff]
    %v1281 = vld [vmem:[%s1275 + $0x28] sm:$0xff]
    %v1283 = vsel %vm21, %v1276, 0
    %v1286 = vsel %vm21, %v1277, 0
    %v1289 = vsel %vm21, %v1278, 0
    %v1292 = vsel %vm21, %v1279, 0
    %v1295 = vsel %vm21, %v1280, 0
    %v1298 = vsel %vm21, %v1281, 0
    %1300 = vmatprep.subr.mxu0 0.0
    %1301 = vmatpush1.msra.mxu0 0.0
    %1302 = vmatprep.subr.mxu0 0.0
    %1303 = vmatpush1.msra.mxu0 0.0
    %1304 = vmatprep.subr.mxu0 0.0
    %1305 = vmatpush1.msra.mxu0 0.0
    %1306 = vmatprep.subr.mxu0 0.0
    %1307 = vmatpush1.msra.mxu0 0.0
    %1308 = vmatprep.subr.mxu0 0.0
    %1309 = vmatpush1.msra.mxu0 0.0
    %1310 = vmatprep.subr.mxu0 0.0
    %1311 = vmatpush1.msra.mxu0 0.0
    %1312 = vmatprep.subr.mxu0 0.0
    %1313 = vmatpush1.msra.mxu0 0.0
    %1314 = vmatprep.subr.mxu0 0.0
    %1315 = vmatpush1.msra.mxu0 0.0
    %1316 = vmatprep.subr.mxu0 0.0
    %1317 = vmatpush1.msra.mxu0 0.0
    %1318 = vmatprep.subr.mxu0 0.0
    %1319 = vmatpush1.msra.mxu0 0.0
    %1320 = vmatprep.subr.mxu0 0.0
    %1321 = vmatpush1.msra.mxu0 0.0
    %1322 = vmatprep.subr.mxu0 0.0
    %1323 = vmatpush1.msra.mxu0 0.0
    %1324 = vmatprep.subr.mxu0 0.0
    %1325 = vmatpush1.msra.mxu0 0.0
    %1326 = vmatprep.subr.mxu0 0.0
    %1327 = vmatpush1.msra.mxu0 %v14
    %1328 = vmatprep.subr.mxu0 0.0
    %1329 = vmatpush1.msra.mxu0 %v1274
    %1330 = vmatprep.subr.mxu0 0.0
    %1331 = vmatpush1.msra.mxu0 %v1273
    %1332 = vmatprep.subr.mxu0 0.0
    %1333 = vmatpush2.msra.mxu0 0.0
    %1334 = vmatprep.subr.mxu0 0.0
    %1335 = vmatpush2.msra.mxu0 0.0
    %1336 = vmatprep.subr.mxu0 0.0
    %1337 = vmatpush2.msra.mxu0 0.0
    %1338 = vmatprep.subr.mxu0 0.0
    %1339 = vmatpush2.msra.mxu0 0.0
    %1340 = vmatprep.subr.mxu0 0.0
    %1341 = vmatpush2.msra.mxu0 0.0
    %1342 = vmatprep.subr.mxu0 0.0
    %1343 = vmatpush2.msra.mxu0 0.0
    %1344 = vmatprep.subr.mxu0 0.0
    %1345 = vmatpush2.msra.mxu0 0.0
    %1346 = vmatprep.subr.mxu0 0.0
    %1347 = vmatpush2.msra.mxu0 0.0
    %1348 = vmatprep.subr.mxu0 0.0
    %1349 = vmatpush2.msra.mxu0 0.0
    %1350 = vmatprep.subr.mxu0 0.0
    %1351 = vmatpush2.msra.mxu0 0.0
    %1352 = vmatprep.subr.mxu0 0.0
    %1353 = vmatpush2.msra.mxu0 0.0
    %1354 = vmatprep.subr.mxu0 0.0
    %1355 = vmatpush2.msra.mxu0 0.0
    %1356 = vmatprep.subr.mxu0 0.0
    %1357 = vmatpush2.msra.mxu0 0.0
    %1358 = vmatprep.subr.mxu0 0.0
    %1359 = vmatpush2.msra.mxu0 0.0
    %1360 = vmatprep.subr.mxu0 0.0
    %1361 = vmatpush2.msra.mxu0 0.0
    %1362 = vmatprep.subr.mxu0 0.0
    %1363 = vmatpush2.msra.mxu0 0.0
    %1364 = vmatprep.mubr.f32.mxu0 0.0
    %1365 = vmatmul.mubr.f32.gmra.mxu0 %v1283
    %v1366 = vpop.f32.mrf.mxu0
    %v1367 = vadd.f32 0.0, %v1366
    %v1368 = vpop.f32.mrf.mxu0
    %1369 = vmatprep.mubr.f32.mxu0 0.0
    %1370 = vmatmul.mubr.f32.gmra.mxu0 %v1286
    %v1371 = vpop.f32.mrf.mxu0
    %v1372 = vadd.f32 0.0, %v1371
    %v1373 = vpop.f32.mrf.mxu0
    %1374 = vmatprep.mubr.f32.mxu0 0.0
    %1375 = vmatmul.mubr.f32.gmra.mxu0 %v1289
    %v1376 = vpop.f32.mrf.mxu0
    %v1377 = vadd.f32 0.0, %v1376
    %v1378 = vpop.f32.mrf.mxu0
    %1379 = vmatprep.mubr.f32.mxu0 0.0
    %1380 = vmatmul.mubr.f32.gmra.mxu0 %v1292
    %v1381 = vpop.f32.mrf.mxu0
    %v1382 = vadd.f32 0.0, %v1381
    %v1383 = vpop.f32.mrf.mxu0
    %1384 = vmatprep.mubr.f32.mxu0 0.0
    %1385 = vmatmul.mubr.f32.gmra.mxu0 %v1295
    %v1386 = vpop.f32.mrf.mxu0
    %v1387 = vadd.f32 0.0, %v1386
    %v1388 = vpop.f32.mrf.mxu0
    %1389 = vmatprep.mubr.f32.mxu0 0.0
    %1390 = vmatmul.mubr.f32.gmra.mxu0 %v1298
    %v1391 = vpop.f32.mrf.mxu0
    %v1392 = vadd.f32 0.0, %v1391
    %v1393 = vpop.f32.mrf.mxu0
    %1394 = vdwg.mxu0
    %v1395 = vtanh.pop %v1367
    %v1396 = vtanh.pop %v1372
    %v1397 = vtanh.pop %v1377
    %v1398 = vtanh.pop %v1382
    %v1399 = vtanh.pop %v1387
    %v1400 = vtanh.pop %v1392
    %v1401 = vmul.f32 %v1395, 0.5
    %v1402 = vmul.f32 %v1396, 0.5
    %v1403 = vadd.f32 %v1401, 0.5
    %v1404 = vadd.f32 %v1402, 0.5
    %v1405 = vmul.f32 %v1399, 0.5
    %v1406 = vmul.f32 %v1400, 0.5
    %v1407 = vadd.f32 %v1405, 0.5
    %v1408 = vadd.f32 %v1406, 0.5
    %v1409 = vmul.f32 %v1403, %v1397
    %v1410 = vmul.f32 %v1404, %v1398
    %v1411 = vtanh.pop %v1409
    %v1412 = vtanh.pop %v1410
    %v1413 = vmul.f32 %v1407, %v1411
    %v1414 = vmul.f32 %v1408, %v1412
    %s1415 = scalar_lea.vmem %s1, 480
    %v1416 = vld [vmem:[%s1415] sm:$0xff]
    %v1417 = vld [vmem:[%s1415 + $0x8] sm:$0xff]
    %v1418 = vld [vmem:[%s1415 + $0x10] sm:$0xff]
    %v1419 = vld [vmem:[%s1415 + $0x18] sm:$0xff]
    %v1420 = vld [vmem:[%s1415 + $0x20] sm:$0xff]
    %v1421 = vld [vmem:[%s1415 + $0x28] sm:$0xff]
    %v1423 = vsel %vm21, %v1416, 0
    %v1426 = vsel %vm21, %v1417, 0
    %v1429 = vsel %vm21, %v1418, 0
    %v1432 = vsel %vm21, %v1419, 0
    %v1435 = vsel %vm21, %v1420, 0
    %v1438 = vsel %vm21, %v1421, 0
    %1440 = vmatprep.subr.mxu0 0.0
    %1441 = vmatpush1.msra.mxu0 0.0
    %1442 = vmatprep.subr.mxu0 0.0
    %1443 = vmatpush1.msra.mxu0 0.0
    %1444 = vmatprep.subr.mxu0 0.0
    %1445 = vmatpush1.msra.mxu0 0.0
    %1446 = vmatprep.subr.mxu0 0.0
    %1447 = vmatpush1.msra.mxu0 0.0
    %1448 = vmatprep.subr.mxu0 0.0
    %1449 = vmatpush1.msra.mxu0 0.0
    %1450 = vmatprep.subr.mxu0 0.0
    %1451 = vmatpush1.msra.mxu0 0.0
    %1452 = vmatprep.subr.mxu0 0.0
    %1453 = vmatpush1.msra.mxu0 0.0
    %1454 = vmatprep.subr.mxu0 0.0
    %1455 = vmatpush1.msra.mxu0 0.0
    %1456 = vmatprep.subr.mxu0 0.0
    %1457 = vmatpush1.msra.mxu0 0.0
    %1458 = vmatprep.subr.mxu0 0.0
    %1459 = vmatpush1.msra.mxu0 0.0
    %1460 = vmatprep.subr.mxu0 0.0
    %1461 = vmatpush1.msra.mxu0 0.0
    %1462 = vmatprep.subr.mxu0 0.0
    %1463 = vmatpush1.msra.mxu0 0.0
    %1464 = vmatprep.subr.mxu0 0.0
    %1465 = vmatpush1.msra.mxu0 0.0
    %1466 = vmatprep.subr.mxu0 0.0
    %1467 = vmatpush1.msra.mxu0 %v14
    %1468 = vmatprep.subr.mxu0 0.0
    %1469 = vmatpush1.msra.mxu0 %v1414
    %1470 = vmatprep.subr.mxu0 0.0
    %1471 = vmatpush1.msra.mxu0 %v1413
    %1472 = vmatprep.subr.mxu0 0.0
    %1473 = vmatpush2.msra.mxu0 0.0
    %1474 = vmatprep.subr.mxu0 0.0
    %1475 = vmatpush2.msra.mxu0 0.0
    %1476 = vmatprep.subr.mxu0 0.0
    %1477 = vmatpush2.msra.mxu0 0.0
    %1478 = vmatprep.subr.mxu0 0.0
    %1479 = vmatpush2.msra.mxu0 0.0
    %1480 = vmatprep.subr.mxu0 0.0
    %1481 = vmatpush2.msra.mxu0 0.0
    %1482 = vmatprep.subr.mxu0 0.0
    %1483 = vmatpush2.msra.mxu0 0.0
    %1484 = vmatprep.subr.mxu0 0.0
    %1485 = vmatpush2.msra.mxu0 0.0
    %1486 = vmatprep.subr.mxu0 0.0
    %1487 = vmatpush2.msra.mxu0 0.0
    %1488 = vmatprep.subr.mxu0 0.0
    %1489 = vmatpush2.msra.mxu0 0.0
    %1490 = vmatprep.subr.mxu0 0.0
    %1491 = vmatpush2.msra.mxu0 0.0
    %1492 = vmatprep.subr.mxu0 0.0
    %1493 = vmatpush2.msra.mxu0 0.0
    %1494 = vmatprep.subr.mxu0 0.0
    %1495 = vmatpush2.msra.mxu0 0.0
    %1496 = vmatprep.subr.mxu0 0.0
    %1497 = vmatpush2.msra.mxu0 0.0
    %1498 = vmatprep.subr.mxu0 0.0
    %1499 = vmatpush2.msra.mxu0 0.0
    %1500 = vmatprep.subr.mxu0 0.0
    %1501 = vmatpush2.msra.mxu0 0.0
    %1502 = vmatprep.subr.mxu0 0.0
    %1503 = vmatpush2.msra.mxu0 0.0
    %1504 = vmatprep.mubr.f32.mxu0 0.0
    %1505 = vmatmul.mubr.f32.gmra.mxu0 %v1423
    %v1506 = vpop.f32.mrf.mxu0
    %v1507 = vadd.f32 0.0, %v1506
    %v1508 = vpop.f32.mrf.mxu0
    %1509 = vmatprep.mubr.f32.mxu0 0.0
    %1510 = vmatmul.mubr.f32.gmra.mxu0 %v1426
    %v1511 = vpop.f32.mrf.mxu0
    %v1512 = vadd.f32 0.0, %v1511
    %v1513 = vpop.f32.mrf.mxu0
    %1514 = vmatprep.mubr.f32.mxu0 0.0
    %1515 = vmatmul.mubr.f32.gmra.mxu0 %v1429
    %v1516 = vpop.f32.mrf.mxu0
    %v1517 = vadd.f32 0.0, %v1516
    %v1518 = vpop.f32.mrf.mxu0
    %1519 = vmatprep.mubr.f32.mxu0 0.0
    %1520 = vmatmul.mubr.f32.gmra.mxu0 %v1432
    %v1521 = vpop.f32.mrf.mxu0
    %v1522 = vadd.f32 0.0, %v1521
    %v1523 = vpop.f32.mrf.mxu0
    %1524 = vmatprep.mubr.f32.mxu0 0.0
    %1525 = vmatmul.mubr.f32.gmra.mxu0 %v1435
    %v1526 = vpop.f32.mrf.mxu0
    %v1527 = vadd.f32 0.0, %v1526
    %v1528 = vpop.f32.mrf.mxu0
    %1529 = vmatprep.mubr.f32.mxu0 0.0
    %1530 = vmatmul.mubr.f32.gmra.mxu0 %v1438
    %v1531 = vpop.f32.mrf.mxu0
    %v1532 = vadd.f32 0.0, %v1531
    %v1533 = vpop.f32.mrf.mxu0
    %1534 = vdwg.mxu0
    %v1535 = vtanh.pop %v1507
    %v1536 = vtanh.pop %v1512
    %v1537 = vtanh.pop %v1517
    %v1538 = vtanh.pop %v1522
    %v1539 = vtanh.pop %v1527
    %v1540 = vtanh.pop %v1532
    %v1541 = vmul.f32 %v1535, 0.5
    %v1542 = vmul.f32 %v1536, 0.5
    %v1543 = vadd.f32 %v1541, 0.5
    %v1544 = vadd.f32 %v1542, 0.5
    %v1545 = vmul.f32 %v1539, 0.5
    %v1546 = vmul.f32 %v1540, 0.5
    %v1547 = vadd.f32 %v1545, 0.5
    %v1548 = vadd.f32 %v1546, 0.5
    %v1549 = vmul.f32 %v1543, %v1537
    %v1550 = vmul.f32 %v1544, %v1538
    %v1551 = vtanh.pop %v1549
    %v1552 = vtanh.pop %v1550
    %v1553 = vmul.f32 %v1547, %v1551
    %v1554 = vmul.f32 %v1548, %v1552
    %s1555 = scalar_lea.vmem %s1, 528
    %v1556 = vld [vmem:[%s1555] sm:$0xff]
    %v1557 = vld [vmem:[%s1555 + $0x8] sm:$0xff]
    %v1558 = vld [vmem:[%s1555 + $0x10] sm:$0xff]
    %v1559 = vld [vmem:[%s1555 + $0x18] sm:$0xff]
    %v1560 = vld [vmem:[%s1555 + $0x20] sm:$0xff]
    %v1561 = vld [vmem:[%s1555 + $0x28] sm:$0xff]
    %v1563 = vsel %vm21, %v1556, 0
    %v1566 = vsel %vm21, %v1557, 0
    %v1569 = vsel %vm21, %v1558, 0
    %v1572 = vsel %vm21, %v1559, 0
    %v1575 = vsel %vm21, %v1560, 0
    %v1578 = vsel %vm21, %v1561, 0
    %1580 = vmatprep.subr.mxu0 0.0
    %1581 = vmatpush1.msra.mxu0 0.0
    %1582 = vmatprep.subr.mxu0 0.0
    %1583 = vmatpush1.msra.mxu0 0.0
    %1584 = vmatprep.subr.mxu0 0.0
    %1585 = vmatpush1.msra.mxu0 0.0
    %1586 = vmatprep.subr.mxu0 0.0
    %1587 = vmatpush1.msra.mxu0 0.0
    %1588 = vmatprep.subr.mxu0 0.0
    %1589 = vmatpush1.msra.mxu0 0.0
    %1590 = vmatprep.subr.mxu0 0.0
    %1591 = vmatpush1.msra.mxu0 0.0
    %1592 = vmatprep.subr.mxu0 0.0
    %1593 = vmatpush1.msra.mxu0 0.0
    %1594 = vmatprep.subr.mxu0 0.0
    %1595 = vmatpush1.msra.mxu0 0.0
    %1596 = vmatprep.subr.mxu0 0.0
    %1597 = vmatpush1.msra.mxu0 0.0
    %1598 = vmatprep.subr.mxu0 0.0
    %1599 = vmatpush1.msra.mxu0 0.0
    %1600 = vmatprep.subr.mxu0 0.0
    %1601 = vmatpush1.msra.mxu0 0.0
    %1602 = vmatprep.subr.mxu0 0.0
    %1603 = vmatpush1.msra.mxu0 0.0
    %1604 = vmatprep.subr.mxu0 0.0
    %1605 = vmatpush1.msra.mxu0 0.0
    %1606 = vmatprep.subr.mxu0 0.0
    %1607 = vmatpush1.msra.mxu0 %v14
    %1608 = vmatprep.subr.mxu0 0.0
    %1609 = vmatpush1.msra.mxu0 %v1554
    %1610 = vmatprep.subr.mxu0 0.0
    %1611 = vmatpush1.msra.mxu0 %v1553
    %1612 = vmatprep.subr.mxu0 0.0
    %1613 = vmatpush2.msra.mxu0 0.0
    %1614 = vmatprep.subr.mxu0 0.0
    %1615 = vmatpush2.msra.mxu0 0.0
    %1616 = vmatprep.subr.mxu0 0.0
    %1617 = vmatpush2.msra.mxu0 0.0
    %1618 = vmatprep.subr.mxu0 0.0
    %1619 = vmatpush2.msra.mxu0 0.0
    %1620 = vmatprep.subr.mxu0 0.0
    %1621 = vmatpush2.msra.mxu0 0.0
    %1622 = vmatprep.subr.mxu0 0.0
    %1623 = vmatpush2.msra.mxu0 0.0
    %1624 = vmatprep.subr.mxu0 0.0
    %1625 = vmatpush2.msra.mxu0 0.0
    %1626 = vmatprep.subr.mxu0 0.0
    %1627 = vmatpush2.msra.mxu0 0.0
    %1628 = vmatprep.subr.mxu0 0.0
    %1629 = vmatpush2.msra.mxu0 0.0
    %1630 = vmatprep.subr.mxu0 0.0
    %1631 = vmatpush2.msra.mxu0 0.0
    %1632 = vmatprep.subr.mxu0 0.0
    %1633 = vmatpush2.msra.mxu0 0.0
    %1634 = vmatprep.subr.mxu0 0.0
    %1635 = vmatpush2.msra.mxu0 0.0
    %1636 = vmatprep.subr.mxu0 0.0
    %1637 = vmatpush2.msra.mxu0 0.0
    %1638 = vmatprep.subr.mxu0 0.0
    %1639 = vmatpush2.msra.mxu0 0.0
    %1640 = vmatprep.subr.mxu0 0.0
    %1641 = vmatpush2.msra.mxu0 0.0
    %1642 = vmatprep.subr.mxu0 0.0
    %1643 = vmatpush2.msra.mxu0 0.0
    %1644 = vmatprep.mubr.f32.mxu0 0.0
    %1645 = vmatmul.mubr.f32.gmra.mxu0 %v1563
    %v1646 = vpop.f32.mrf.mxu0
    %v1647 = vadd.f32 0.0, %v1646
    %v1648 = vpop.f32.mrf.mxu0
    %1649 = vmatprep.mubr.f32.mxu0 0.0
    %1650 = vmatmul.mubr.f32.gmra.mxu0 %v1566
    %v1651 = vpop.f32.mrf.mxu0
    %v1652 = vadd.f32 0.0, %v1651
    %v1653 = vpop.f32.mrf.mxu0
    %1654 = vmatprep.mubr.f32.mxu0 0.0
    %1655 = vmatmul.mubr.f32.gmra.mxu0 %v1569
    %v1656 = vpop.f32.mrf.mxu0
    %v1657 = vadd.f32 0.0, %v1656
    %v1658 = vpop.f32.mrf.mxu0
    %1659 = vmatprep.mubr.f32.mxu0 0.0
    %1660 = vmatmul.mubr.f32.gmra.mxu0 %v1572
    %v1661 = vpop.f32.mrf.mxu0
    %v1662 = vadd.f32 0.0, %v1661
    %v1663 = vpop.f32.mrf.mxu0
    %1664 = vmatprep.mubr.f32.mxu0 0.0
    %1665 = vmatmul.mubr.f32.gmra.mxu0 %v1575
    %v1666 = vpop.f32.mrf.mxu0
    %v1667 = vadd.f32 0.0, %v1666
    %v1668 = vpop.f32.mrf.mxu0
    %1669 = vmatprep.mubr.f32.mxu0 0.0
    %1670 = vmatmul.mubr.f32.gmra.mxu0 %v1578
    %v1671 = vpop.f32.mrf.mxu0
    %v1672 = vadd.f32 0.0, %v1671
    %v1673 = vpop.f32.mrf.mxu0
    %1674 = vdwg.mxu0
    %v1675 = vtanh.pop %v1647
    %v1676 = vtanh.pop %v1652
    %v1677 = vtanh.pop %v1657
    %v1678 = vtanh.pop %v1662
    %v1679 = vtanh.pop %v1667
    %v1680 = vtanh.pop %v1672
    %v1681 = vmul.f32 %v1675, 0.5
    %v1682 = vmul.f32 %v1676, 0.5
    %v1683 = vadd.f32 %v1681, 0.5
    %v1684 = vadd.f32 %v1682, 0.5
    %v1685 = vmul.f32 %v1679, 0.5
    %v1686 = vmul.f32 %v1680, 0.5
    %v1687 = vadd.f32 %v1685, 0.5
    %v1688 = vadd.f32 %v1686, 0.5
    %v1689 = vmul.f32 %v1683, %v1677
    %v1690 = vmul.f32 %v1684, %v1678
    %v1691 = vtanh.pop %v1689
    %v1692 = vtanh.pop %v1690
    %v1693 = vmul.f32 %v1687, %v1691
    %v1694 = vmul.f32 %v1688, %v1692
    %s1695 = scalar_lea.vmem %s1, 576
    %v1696 = vld [vmem:[%s1695] sm:$0xff]
    %v1697 = vld [vmem:[%s1695 + $0x8] sm:$0xff]
    %v1698 = vld [vmem:[%s1695 + $0x10] sm:$0xff]
    %v1699 = vld [vmem:[%s1695 + $0x18] sm:$0xff]
    %v1700 = vld [vmem:[%s1695 + $0x20] sm:$0xff]
    %v1701 = vld [vmem:[%s1695 + $0x28] sm:$0xff]
    %v1703 = vsel %vm21, %v1696, 0
    %v1706 = vsel %vm21, %v1697, 0
    %v1709 = vsel %vm21, %v1698, 0
    %v1712 = vsel %vm21, %v1699, 0
    %v1715 = vsel %vm21, %v1700, 0
    %v1718 = vsel %vm21, %v1701, 0
    %1720 = vmatprep.subr.mxu0 0.0
    %1721 = vmatpush1.msra.mxu0 0.0
    %1722 = vmatprep.subr.mxu0 0.0
    %1723 = vmatpush1.msra.mxu0 0.0
    %1724 = vmatprep.subr.mxu0 0.0
    %1725 = vmatpush1.msra.mxu0 0.0
    %1726 = vmatprep.subr.mxu0 0.0
    %1727 = vmatpush1.msra.mxu0 0.0
    %1728 = vmatprep.subr.mxu0 0.0
    %1729 = vmatpush1.msra.mxu0 0.0
    %1730 = vmatprep.subr.mxu0 0.0
    %1731 = vmatpush1.msra.mxu0 0.0
    %1732 = vmatprep.subr.mxu0 0.0
    %1733 = vmatpush1.msra.mxu0 0.0
    %1734 = vmatprep.subr.mxu0 0.0
    %1735 = vmatpush1.msra.mxu0 0.0
    %1736 = vmatprep.subr.mxu0 0.0
    %1737 = vmatpush1.msra.mxu0 0.0
    %1738 = vmatprep.subr.mxu0 0.0
    %1739 = vmatpush1.msra.mxu0 0.0
    %1740 = vmatprep.subr.mxu0 0.0
    %1741 = vmatpush1.msra.mxu0 0.0
    %1742 = vmatprep.subr.mxu0 0.0
    %1743 = vmatpush1.msra.mxu0 0.0
    %1744 = vmatprep.subr.mxu0 0.0
    %1745 = vmatpush1.msra.mxu0 0.0
    %1746 = vmatprep.subr.mxu0 0.0
    %1747 = vmatpush1.msra.mxu0 %v14
    %1748 = vmatprep.subr.mxu0 0.0
    %1749 = vmatpush1.msra.mxu0 %v1694
    %1750 = vmatprep.subr.mxu0 0.0
    %1751 = vmatpush1.msra.mxu0 %v1693
    %1752 = vmatprep.subr.mxu0 0.0
    %1753 = vmatpush2.msra.mxu0 0.0
    %1754 = vmatprep.subr.mxu0 0.0
    %1755 = vmatpush2.msra.mxu0 0.0
    %1756 = vmatprep.subr.mxu0 0.0
    %1757 = vmatpush2.msra.mxu0 0.0
    %1758 = vmatprep.subr.mxu0 0.0
    %1759 = vmatpush2.msra.mxu0 0.0
    %1760 = vmatprep.subr.mxu0 0.0
    %1761 = vmatpush2.msra.mxu0 0.0
    %1762 = vmatprep.subr.mxu0 0.0
    %1763 = vmatpush2.msra.mxu0 0.0
    %1764 = vmatprep.subr.mxu0 0.0
    %1765 = vmatpush2.msra.mxu0 0.0
    %1766 = vmatprep.subr.mxu0 0.0
    %1767 = vmatpush2.msra.mxu0 0.0
    %1768 = vmatprep.subr.mxu0 0.0
    %1769 = vmatpush2.msra.mxu0 0.0
    %1770 = vmatprep.subr.mxu0 0.0
    %1771 = vmatpush2.msra.mxu0 0.0
    %1772 = vmatprep.subr.mxu0 0.0
    %1773 = vmatpush2.msra.mxu0 0.0
    %1774 = vmatprep.subr.mxu0 0.0
    %1775 = vmatpush2.msra.mxu0 0.0
    %1776 = vmatprep.subr.mxu0 0.0
    %1777 = vmatpush2.msra.mxu0 0.0
    %1778 = vmatprep.subr.mxu0 0.0
    %1779 = vmatpush2.msra.mxu0 0.0
    %1780 = vmatprep.subr.mxu0 0.0
    %1781 = vmatpush2.msra.mxu0 0.0
    %1782 = vmatprep.subr.mxu0 0.0
    %1783 = vmatpush2.msra.mxu0 0.0
    %1784 = vmatprep.mubr.f32.mxu0 0.0
    %1785 = vmatmul.mubr.f32.gmra.mxu0 %v1703
    %v1786 = vpop.f32.mrf.mxu0
    %v1787 = vadd.f32 0.0, %v1786
    %v1788 = vpop.f32.mrf.mxu0
    %1789 = vmatprep.mubr.f32.mxu0 0.0
    %1790 = vmatmul.mubr.f32.gmra.mxu0 %v1706
    %v1791 = vpop.f32.mrf.mxu0
    %v1792 = vadd.f32 0.0, %v1791
    %v1793 = vpop.f32.mrf.mxu0
    %1794 = vmatprep.mubr.f32.mxu0 0.0
    %1795 = vmatmul.mubr.f32.gmra.mxu0 %v1709
    %v1796 = vpop.f32.mrf.mxu0
    %v1797 = vadd.f32 0.0, %v1796
    %v1798 = vpop.f32.mrf.mxu0
    %1799 = vmatprep.mubr.f32.mxu0 0.0
    %1800 = vmatmul.mubr.f32.gmra.mxu0 %v1712
    %v1801 = vpop.f32.mrf.mxu0
    %v1802 = vadd.f32 0.0, %v1801
    %v1803 = vpop.f32.mrf.mxu0
    %1804 = vmatprep.mubr.f32.mxu0 0.0
    %1805 = vmatmul.mubr.f32.gmra.mxu0 %v1715
    %v1806 = vpop.f32.mrf.mxu0
    %v1807 = vadd.f32 0.0, %v1806
    %v1808 = vpop.f32.mrf.mxu0
    %1809 = vmatprep.mubr.f32.mxu0 0.0
    %1810 = vmatmul.mubr.f32.gmra.mxu0 %v1718
    %v1811 = vpop.f32.mrf.mxu0
    %v1812 = vadd.f32 0.0, %v1811
    %v1813 = vpop.f32.mrf.mxu0
    %1814 = vdwg.mxu0
    %v1815 = vtanh.pop %v1787
    %v1816 = vtanh.pop %v1792
    %v1817 = vtanh.pop %v1797
    %v1818 = vtanh.pop %v1802
    %v1819 = vtanh.pop %v1807
    %v1820 = vtanh.pop %v1812
    %v1821 = vmul.f32 %v1815, 0.5
    %v1822 = vmul.f32 %v1816, 0.5
    %v1823 = vadd.f32 %v1821, 0.5
    %v1824 = vadd.f32 %v1822, 0.5
    %v1825 = vmul.f32 %v1819, 0.5
    %v1826 = vmul.f32 %v1820, 0.5
    %v1827 = vadd.f32 %v1825, 0.5
    %v1828 = vadd.f32 %v1826, 0.5
    %v1829 = vmul.f32 %v1823, %v1817
    %v1830 = vmul.f32 %v1824, %v1818
    %v1831 = vtanh.pop %v1829
    %v1832 = vtanh.pop %v1830
    %v1833 = vmul.f32 %v1827, %v1831
    %v1834 = vmul.f32 %v1828, %v1832
    %s1835 = scalar_lea.vmem %s1, 624
    %v1836 = vld [vmem:[%s1835] sm:$0xff]
    %v1837 = vld [vmem:[%s1835 + $0x8] sm:$0xff]
    %v1838 = vld [vmem:[%s1835 + $0x10] sm:$0xff]
    %v1839 = vld [vmem:[%s1835 + $0x18] sm:$0xff]
    %v1840 = vld [vmem:[%s1835 + $0x20] sm:$0xff]
    %v1841 = vld [vmem:[%s1835 + $0x28] sm:$0xff]
    %v1843 = vsel %vm21, %v1836, 0
    %v1846 = vsel %vm21, %v1837, 0
    %v1849 = vsel %vm21, %v1838, 0
    %v1852 = vsel %vm21, %v1839, 0
    %v1855 = vsel %vm21, %v1840, 0
    %v1858 = vsel %vm21, %v1841, 0
    %1860 = vmatprep.subr.mxu0 0.0
    %1861 = vmatpush1.msra.mxu0 0.0
    %1862 = vmatprep.subr.mxu0 0.0
    %1863 = vmatpush1.msra.mxu0 0.0
    %1864 = vmatprep.subr.mxu0 0.0
    %1865 = vmatpush1.msra.mxu0 0.0
    %1866 = vmatprep.subr.mxu0 0.0
    %1867 = vmatpush1.msra.mxu0 0.0
    %1868 = vmatprep.subr.mxu0 0.0
    %1869 = vmatpush1.msra.mxu0 0.0
    %1870 = vmatprep.subr.mxu0 0.0
    %1871 = vmatpush1.msra.mxu0 0.0
    %1872 = vmatprep.subr.mxu0 0.0
    %1873 = vmatpush1.msra.mxu0 0.0
    %1874 = vmatprep.subr.mxu0 0.0
    %1875 = vmatpush1.msra.mxu0 0.0
    %1876 = vmatprep.subr.mxu0 0.0
    %1877 = vmatpush1.msra.mxu0 0.0
    %1878 = vmatprep.subr.mxu0 0.0
    %1879 = vmatpush1.msra.mxu0 0.0
    %1880 = vmatprep.subr.mxu0 0.0
    %1881 = vmatpush1.msra.mxu0 0.0
    %1882 = vmatprep.subr.mxu0 0.0
    %1883 = vmatpush1.msra.mxu0 0.0
    %1884 = vmatprep.subr.mxu0 0.0
    %1885 = vmatpush1.msra.mxu0 0.0
    %1886 = vmatprep.subr.mxu0 0.0
    %1887 = vmatpush1.msra.mxu0 %v14
    %1888 = vmatprep.subr.mxu0 0.0
    %1889 = vmatpush1.msra.mxu0 %v1834
    %1890 = vmatprep.subr.mxu0 0.0
    %1891 = vmatpush1.msra.mxu0 %v1833
    %1892 = vmatprep.subr.mxu0 0.0
    %1893 = vmatpush2.msra.mxu0 0.0
    %1894 = vmatprep.subr.mxu0 0.0
    %1895 = vmatpush2.msra.mxu0 0.0
    %1896 = vmatprep.subr.mxu0 0.0
    %1897 = vmatpush2.msra.mxu0 0.0
    %1898 = vmatprep.subr.mxu0 0.0
    %1899 = vmatpush2.msra.mxu0 0.0
    %1900 = vmatprep.subr.mxu0 0.0
    %1901 = vmatpush2.msra.mxu0 0.0
    %1902 = vmatprep.subr.mxu0 0.0
    %1903 = vmatpush2.msra.mxu0 0.0
    %1904 = vmatprep.subr.mxu0 0.0
    %1905 = vmatpush2.msra.mxu0 0.0
    %1906 = vmatprep.subr.mxu0 0.0
    %1907 = vmatpush2.msra.mxu0 0.0
    %1908 = vmatprep.subr.mxu0 0.0
    %1909 = vmatpush2.msra.mxu0 0.0
    %1910 = vmatprep.subr.mxu0 0.0
    %1911 = vmatpush2.msra.mxu0 0.0
    %1912 = vmatprep.subr.mxu0 0.0
    %1913 = vmatpush2.msra.mxu0 0.0
    %1914 = vmatprep.subr.mxu0 0.0
    %1915 = vmatpush2.msra.mxu0 0.0
    %1916 = vmatprep.subr.mxu0 0.0
    %1917 = vmatpush2.msra.mxu0 0.0
    %1918 = vmatprep.subr.mxu0 0.0
    %1919 = vmatpush2.msra.mxu0 0.0
    %1920 = vmatprep.subr.mxu0 0.0
    %1921 = vmatpush2.msra.mxu0 0.0
    %1922 = vmatprep.subr.mxu0 0.0
    %1923 = vmatpush2.msra.mxu0 0.0
    %1924 = vmatprep.mubr.f32.mxu0 0.0
    %1925 = vmatmul.mubr.f32.gmra.mxu0 %v1843
    %v1926 = vpop.f32.mrf.mxu0
    %v1927 = vadd.f32 0.0, %v1926
    %v1928 = vpop.f32.mrf.mxu0
    %1929 = vmatprep.mubr.f32.mxu0 0.0
    %1930 = vmatmul.mubr.f32.gmra.mxu0 %v1846
    %v1931 = vpop.f32.mrf.mxu0
    %v1932 = vadd.f32 0.0, %v1931
    %v1933 = vpop.f32.mrf.mxu0
    %1934 = vmatprep.mubr.f32.mxu0 0.0
    %1935 = vmatmul.mubr.f32.gmra.mxu0 %v1849
    %v1936 = vpop.f32.mrf.mxu0
    %v1937 = vadd.f32 0.0, %v1936
    %v1938 = vpop.f32.mrf.mxu0
    %1939 = vmatprep.mubr.f32.mxu0 0.0
    %1940 = vmatmul.mubr.f32.gmra.mxu0 %v1852
    %v1941 = vpop.f32.mrf.mxu0
    %v1942 = vadd.f32 0.0, %v1941
    %v1943 = vpop.f32.mrf.mxu0
    %1944 = vmatprep.mubr.f32.mxu0 0.0
    %1945 = vmatmul.mubr.f32.gmra.mxu0 %v1855
    %v1946 = vpop.f32.mrf.mxu0
    %v1947 = vadd.f32 0.0, %v1946
    %v1948 = vpop.f32.mrf.mxu0
    %1949 = vmatprep.mubr.f32.mxu0 0.0
    %1950 = vmatmul.mubr.f32.gmra.mxu0 %v1858
    %v1951 = vpop.f32.mrf.mxu0
    %v1952 = vadd.f32 0.0, %v1951
    %v1953 = vpop.f32.mrf.mxu0
    %1954 = vdwg.mxu0
    %v1955 = vtanh.pop %v1927
    %v1956 = vtanh.pop %v1932
    %v1957 = vtanh.pop %v1937
    %v1958 = vtanh.pop %v1942
    %v1959 = vtanh.pop %v1947
    %v1960 = vtanh.pop %v1952
    %v1961 = vmul.f32 %v1955, 0.5
    %v1962 = vmul.f32 %v1956, 0.5
    %v1963 = vadd.f32 %v1961, 0.5
    %v1964 = vadd.f32 %v1962, 0.5
    %v1965 = vmul.f32 %v1959, 0.5
    %v1966 = vmul.f32 %v1960, 0.5
    %v1967 = vadd.f32 %v1965, 0.5
    %v1968 = vadd.f32 %v1966, 0.5
    %v1969 = vmul.f32 %v1963, %v1957
    %v1970 = vmul.f32 %v1964, %v1958
    %v1971 = vtanh.pop %v1969
    %v1972 = vtanh.pop %v1970
    %v1973 = vmul.f32 %v1967, %v1971
    %v1974 = vmul.f32 %v1968, %v1972
    %s1975 = scalar_lea.vmem %s1, 672
    %v1976 = vld [vmem:[%s1975] sm:$0xff]
    %v1977 = vld [vmem:[%s1975 + $0x8] sm:$0xff]
    %v1978 = vld [vmem:[%s1975 + $0x10] sm:$0xff]
    %v1979 = vld [vmem:[%s1975 + $0x18] sm:$0xff]
    %v1980 = vld [vmem:[%s1975 + $0x20] sm:$0xff]
    %v1981 = vld [vmem:[%s1975 + $0x28] sm:$0xff]
    %v1983 = vsel %vm21, %v1976, 0
    %v1986 = vsel %vm21, %v1977, 0
    %v1989 = vsel %vm21, %v1978, 0
    %v1992 = vsel %vm21, %v1979, 0
    %v1995 = vsel %vm21, %v1980, 0
    %v1998 = vsel %vm21, %v1981, 0
    %2000 = vmatprep.subr.mxu0 0.0
    %2001 = vmatpush1.msra.mxu0 0.0
    %2002 = vmatprep.subr.mxu0 0.0
    %2003 = vmatpush1.msra.mxu0 0.0
    %2004 = vmatprep.subr.mxu0 0.0
    %2005 = vmatpush1.msra.mxu0 0.0
    %2006 = vmatprep.subr.mxu0 0.0
    %2007 = vmatpush1.msra.mxu0 0.0
    %2008 = vmatprep.subr.mxu0 0.0
    %2009 = vmatpush1.msra.mxu0 0.0
    %2010 = vmatprep.subr.mxu0 0.0
    %2011 = vmatpush1.msra.mxu0 0.0
    %2012 = vmatprep.subr.mxu0 0.0
    %2013 = vmatpush1.msra.mxu0 0.0
    %2014 = vmatprep.subr.mxu0 0.0
    %2015 = vmatpush1.msra.mxu0 0.0
    %2016 = vmatprep.subr.mxu0 0.0
    %2017 = vmatpush1.msra.mxu0 0.0
    %2018 = vmatprep.subr.mxu0 0.0
    %2019 = vmatpush1.msra.mxu0 0.0
    %2020 = vmatprep.subr.mxu0 0.0
    %2021 = vmatpush1.msra.mxu0 0.0
    %2022 = vmatprep.subr.mxu0 0.0
    %2023 = vmatpush1.msra.mxu0 0.0
    %2024 = vmatprep.subr.mxu0 0.0
    %2025 = vmatpush1.msra.mxu0 0.0
    %2026 = vmatprep.subr.mxu0 0.0
    %2027 = vmatpush1.msra.mxu0 %v14
    %2028 = vmatprep.subr.mxu0 0.0
    %2029 = vmatpush1.msra.mxu0 %v1974
    %2030 = vmatprep.subr.mxu0 0.0
    %2031 = vmatpush1.msra.mxu0 %v1973
    %2032 = vmatprep.subr.mxu0 0.0
    %2033 = vmatpush2.msra.mxu0 0.0
    %2034 = vmatprep.subr.mxu0 0.0
    %2035 = vmatpush2.msra.mxu0 0.0
    %2036 = vmatprep.subr.mxu0 0.0
    %2037 = vmatpush2.msra.mxu0 0.0
    %2038 = vmatprep.subr.mxu0 0.0
    %2039 = vmatpush2.msra.mxu0 0.0
    %2040 = vmatprep.subr.mxu0 0.0
    %2041 = vmatpush2.msra.mxu0 0.0
    %2042 = vmatprep.subr.mxu0 0.0
    %2043 = vmatpush2.msra.mxu0 0.0
    %2044 = vmatprep.subr.mxu0 0.0
    %2045 = vmatpush2.msra.mxu0 0.0
    %2046 = vmatprep.subr.mxu0 0.0
    %2047 = vmatpush2.msra.mxu0 0.0
    %2048 = vmatprep.subr.mxu0 0.0
    %2049 = vmatpush2.msra.mxu0 0.0
    %2050 = vmatprep.subr.mxu0 0.0
    %2051 = vmatpush2.msra.mxu0 0.0
    %2052 = vmatprep.subr.mxu0 0.0
    %2053 = vmatpush2.msra.mxu0 0.0
    %2054 = vmatprep.subr.mxu0 0.0
    %2055 = vmatpush2.msra.mxu0 0.0
    %2056 = vmatprep.subr.mxu0 0.0
    %2057 = vmatpush2.msra.mxu0 0.0
    %2058 = vmatprep.subr.mxu0 0.0
    %2059 = vmatpush2.msra.mxu0 0.0
    %2060 = vmatprep.subr.mxu0 0.0
    %2061 = vmatpush2.msra.mxu0 0.0
    %2062 = vmatprep.subr.mxu0 0.0
    %2063 = vmatpush2.msra.mxu0 0.0
    %2064 = vmatprep.mubr.f32.mxu0 0.0
    %2065 = vmatmul.mubr.f32.gmra.mxu0 %v1983
    %v2066 = vpop.f32.mrf.mxu0
    %v2067 = vadd.f32 0.0, %v2066
    %v2068 = vpop.f32.mrf.mxu0
    %2069 = vmatprep.mubr.f32.mxu0 0.0
    %2070 = vmatmul.mubr.f32.gmra.mxu0 %v1986
    %v2071 = vpop.f32.mrf.mxu0
    %v2072 = vadd.f32 0.0, %v2071
    %v2073 = vpop.f32.mrf.mxu0
    %2074 = vmatprep.mubr.f32.mxu0 0.0
    %2075 = vmatmul.mubr.f32.gmra.mxu0 %v1989
    %v2076 = vpop.f32.mrf.mxu0
    %v2077 = vadd.f32 0.0, %v2076
    %v2078 = vpop.f32.mrf.mxu0
    %2079 = vmatprep.mubr.f32.mxu0 0.0
    %2080 = vmatmul.mubr.f32.gmra.mxu0 %v1992
    %v2081 = vpop.f32.mrf.mxu0
    %v2082 = vadd.f32 0.0, %v2081
    %v2083 = vpop.f32.mrf.mxu0
    %2084 = vmatprep.mubr.f32.mxu0 0.0
    %2085 = vmatmul.mubr.f32.gmra.mxu0 %v1995
    %v2086 = vpop.f32.mrf.mxu0
    %v2087 = vadd.f32 0.0, %v2086
    %v2088 = vpop.f32.mrf.mxu0
    %2089 = vmatprep.mubr.f32.mxu0 0.0
    %2090 = vmatmul.mubr.f32.gmra.mxu0 %v1998
    %v2091 = vpop.f32.mrf.mxu0
    %v2092 = vadd.f32 0.0, %v2091
    %v2093 = vpop.f32.mrf.mxu0
    %2094 = vdwg.mxu0
    %v2095 = vtanh.pop %v2067
    %v2096 = vtanh.pop %v2072
    %v2097 = vtanh.pop %v2077
    %v2098 = vtanh.pop %v2082
    %v2099 = vtanh.pop %v2087
    %v2100 = vtanh.pop %v2092
    %v2101 = vmul.f32 %v2095, 0.5
    %v2102 = vmul.f32 %v2096, 0.5
    %v2103 = vadd.f32 %v2101, 0.5
    %v2104 = vadd.f32 %v2102, 0.5
    %v2105 = vmul.f32 %v2099, 0.5
    %v2106 = vmul.f32 %v2100, 0.5
    %v2107 = vadd.f32 %v2105, 0.5
    %v2108 = vadd.f32 %v2106, 0.5
    %v2109 = vmul.f32 %v2103, %v2097
    %v2110 = vmul.f32 %v2104, %v2098
    %v2111 = vtanh.pop %v2109
    %v2112 = vtanh.pop %v2110
    %v2113 = vmul.f32 %v2107, %v2111
    %v2114 = vmul.f32 %v2108, %v2112
    %s2115 = scalar_lea.vmem %s1, 720
    %v2116 = vld [vmem:[%s2115] sm:$0xff]
    %v2117 = vld [vmem:[%s2115 + $0x8] sm:$0xff]
    %v2118 = vld [vmem:[%s2115 + $0x10] sm:$0xff]
    %v2119 = vld [vmem:[%s2115 + $0x18] sm:$0xff]
    %v2120 = vld [vmem:[%s2115 + $0x20] sm:$0xff]
    %v2121 = vld [vmem:[%s2115 + $0x28] sm:$0xff]
    %v2123 = vsel %vm21, %v2116, 0
    %v2126 = vsel %vm21, %v2117, 0
    %v2129 = vsel %vm21, %v2118, 0
    %v2132 = vsel %vm21, %v2119, 0
    %v2135 = vsel %vm21, %v2120, 0
    %v2138 = vsel %vm21, %v2121, 0
    %2140 = vmatprep.subr.mxu0 0.0
    %2141 = vmatpush1.msra.mxu0 0.0
    %2142 = vmatprep.subr.mxu0 0.0
    %2143 = vmatpush1.msra.mxu0 0.0
    %2144 = vmatprep.subr.mxu0 0.0
    %2145 = vmatpush1.msra.mxu0 0.0
    %2146 = vmatprep.subr.mxu0 0.0
    %2147 = vmatpush1.msra.mxu0 0.0
    %2148 = vmatprep.subr.mxu0 0.0
    %2149 = vmatpush1.msra.mxu0 0.0
    %2150 = vmatprep.subr.mxu0 0.0
    %2151 = vmatpush1.msra.mxu0 0.0
    %2152 = vmatprep.subr.mxu0 0.0
    %2153 = vmatpush1.msra.mxu0 0.0
    %2154 = vmatprep.subr.mxu0 0.0
    %2155 = vmatpush1.msra.mxu0 0.0
    %2156 = vmatprep.subr.mxu0 0.0
    %2157 = vmatpush1.msra.mxu0 0.0
    %2158 = vmatprep.subr.mxu0 0.0
    %2159 = vmatpush1.msra.mxu0 0.0
    %2160 = vmatprep.subr.mxu0 0.0
    %2161 = vmatpush1.msra.mxu0 0.0
    %2162 = vmatprep.subr.mxu0 0.0
    %2163 = vmatpush1.msra.mxu0 0.0
    %2164 = vmatprep.subr.mxu0 0.0
    %2165 = vmatpush1.msra.mxu0 0.0
    %2166 = vmatprep.subr.mxu0 0.0
    %2167 = vmatpush1.msra.mxu0 %v14
    %2168 = vmatprep.subr.mxu0 0.0
    %2169 = vmatpush1.msra.mxu0 %v2114
    %2170 = vmatprep.subr.mxu0 0.0
    %2171 = vmatpush1.msra.mxu0 %v2113
    %2172 = vmatprep.subr.mxu0 0.0
    %2173 = vmatpush2.msra.mxu0 0.0
    %2174 = vmatprep.subr.mxu0 0.0
    %2175 = vmatpush2.msra.mxu0 0.0
    %2176 = vmatprep.subr.mxu0 0.0
    %2177 = vmatpush2.msra.mxu0 0.0
    %2178 = vmatprep.subr.mxu0 0.0
    %2179 = vmatpush2.msra.mxu0 0.0
    %2180 = vmatprep.subr.mxu0 0.0
    %2181 = vmatpush2.msra.mxu0 0.0
    %2182 = vmatprep.subr.mxu0 0.0
    %2183 = vmatpush2.msra.mxu0 0.0
    %2184 = vmatprep.subr.mxu0 0.0
    %2185 = vmatpush2.msra.mxu0 0.0
    %2186 = vmatprep.subr.mxu0 0.0
    %2187 = vmatpush2.msra.mxu0 0.0
    %2188 = vmatprep.subr.mxu0 0.0
    %2189 = vmatpush2.msra.mxu0 0.0
    %2190 = vmatprep.subr.mxu0 0.0
    %2191 = vmatpush2.msra.mxu0 0.0
    %2192 = vmatprep.subr.mxu0 0.0
    %2193 = vmatpush2.msra.mxu0 0.0
    %2194 = vmatprep.subr.mxu0 0.0
    %2195 = vmatpush2.msra.mxu0 0.0
    %2196 = vmatprep.subr.mxu0 0.0
    %2197 = vmatpush2.msra.mxu0 0.0
    %2198 = vmatprep.subr.mxu0 0.0
    %2199 = vmatpush2.msra.mxu0 0.0
    %2200 = vmatprep.subr.mxu0 0.0
    %2201 = vmatpush2.msra.mxu0 0.0
    %2202 = vmatprep.subr.mxu0 0.0
    %2203 = vmatpush2.msra.mxu0 0.0
    %2204 = vmatprep.mubr.f32.mxu0 0.0
    %2205 = vmatmul.mubr.f32.gmra.mxu0 %v2123
    %v2206 = vpop.f32.mrf.mxu0
    %v2207 = vadd.f32 0.0, %v2206
    %v2208 = vpop.f32.mrf.mxu0
    %2209 = vmatprep.mubr.f32.mxu0 0.0
    %2210 = vmatmul.mubr.f32.gmra.mxu0 %v2126
    %v2211 = vpop.f32.mrf.mxu0
    %v2212 = vadd.f32 0.0, %v2211
    %v2213 = vpop.f32.mrf.mxu0
    %2214 = vmatprep.mubr.f32.mxu0 0.0
    %2215 = vmatmul.mubr.f32.gmra.mxu0 %v2129
    %v2216 = vpop.f32.mrf.mxu0
    %v2217 = vadd.f32 0.0, %v2216
    %v2218 = vpop.f32.mrf.mxu0
    %2219 = vmatprep.mubr.f32.mxu0 0.0
    %2220 = vmatmul.mubr.f32.gmra.mxu0 %v2132
    %v2221 = vpop.f32.mrf.mxu0
    %v2222 = vadd.f32 0.0, %v2221
    %v2223 = vpop.f32.mrf.mxu0
    %2224 = vmatprep.mubr.f32.mxu0 0.0
    %2225 = vmatmul.mubr.f32.gmra.mxu0 %v2135
    %v2226 = vpop.f32.mrf.mxu0
    %v2227 = vadd.f32 0.0, %v2226
    %v2228 = vpop.f32.mrf.mxu0
    %2229 = vmatprep.mubr.f32.mxu0 0.0
    %2230 = vmatmul.mubr.f32.gmra.mxu0 %v2138
    %v2231 = vpop.f32.mrf.mxu0
    %v2232 = vadd.f32 0.0, %v2231
    %v2233 = vpop.f32.mrf.mxu0
    %2234 = vdwg.mxu0
    %v2235 = vtanh.pop %v2207
    %v2236 = vtanh.pop %v2212
    %v2237 = vtanh.pop %v2217
    %v2238 = vtanh.pop %v2222
    %v2239 = vtanh.pop %v2227
    %v2240 = vtanh.pop %v2232
    %v2241 = vmul.f32 %v2235, 0.5
    %v2242 = vmul.f32 %v2236, 0.5
    %v2243 = vadd.f32 %v2241, 0.5
    %v2244 = vadd.f32 %v2242, 0.5
    %v2245 = vmul.f32 %v2239, 0.5
    %v2246 = vmul.f32 %v2240, 0.5
    %v2247 = vadd.f32 %v2245, 0.5
    %v2248 = vadd.f32 %v2246, 0.5
    %v2249 = vmul.f32 %v2243, %v2237
    %v2250 = vmul.f32 %v2244, %v2238
    %v2251 = vtanh.pop %v2249
    %v2252 = vtanh.pop %v2250
    %v2253 = vmul.f32 %v2247, %v2251
    %v2254 = vmul.f32 %v2248, %v2252
    %s2255 = scalar_lea.vmem %s1, 768
    %v2256 = vld [vmem:[%s2255] sm:$0xff]
    %v2258 = vsel %vm21, %v2256, 0
    %2260 = vmatprep.subr.mxu0 0.0
    %2261 = vmatpush1.msra.mxu0 0.0
    %2262 = vmatprep.subr.mxu0 0.0
    %2263 = vmatpush1.msra.mxu0 0.0
    %2264 = vmatprep.subr.mxu0 0.0
    %2265 = vmatpush1.msra.mxu0 0.0
    %2266 = vmatprep.subr.mxu0 0.0
    %2267 = vmatpush1.msra.mxu0 0.0
    %2268 = vmatprep.subr.mxu0 0.0
    %2269 = vmatpush1.msra.mxu0 0.0
    %2270 = vmatprep.subr.mxu0 0.0
    %2271 = vmatpush1.msra.mxu0 0.0
    %2272 = vmatprep.subr.mxu0 0.0
    %2273 = vmatpush1.msra.mxu0 0.0
    %2274 = vmatprep.subr.mxu0 0.0
    %2275 = vmatpush1.msra.mxu0 0.0
    %2276 = vmatprep.subr.mxu0 0.0
    %2277 = vmatpush1.msra.mxu0 0.0
    %2278 = vmatprep.subr.mxu0 0.0
    %2279 = vmatpush1.msra.mxu0 0.0
    %2280 = vmatprep.subr.mxu0 0.0
    %2281 = vmatpush1.msra.mxu0 0.0
    %2282 = vmatprep.subr.mxu0 0.0
    %2283 = vmatpush1.msra.mxu0 0.0
    %2284 = vmatprep.subr.mxu0 0.0
    %2285 = vmatpush1.msra.mxu0 0.0
    %2286 = vmatprep.subr.mxu0 0.0
    %2287 = vmatpush1.msra.mxu0 %v14
    %2288 = vmatprep.subr.mxu0 0.0
    %2289 = vmatpush1.msra.mxu0 %v2254
    %2290 = vmatprep.subr.mxu0 0.0
    %2291 = vmatpush1.msra.mxu0 %v2253
    %2292 = vmatprep.subr.mxu0 0.0
    %2293 = vmatpush2.msra.mxu0 0.0
    %2294 = vmatprep.subr.mxu0 0.0
    %2295 = vmatpush2.msra.mxu0 0.0
    %2296 = vmatprep.subr.mxu0 0.0
    %2297 = vmatpush2.msra.mxu0 0.0
    %2298 = vmatprep.subr.mxu0 0.0
    %2299 = vmatpush2.msra.mxu0 0.0
    %2300 = vmatprep.subr.mxu0 0.0
    %2301 = vmatpush2.msra.mxu0 0.0
    %2302 = vmatprep.subr.mxu0 0.0
    %2303 = vmatpush2.msra.mxu0 0.0
    %2304 = vmatprep.subr.mxu0 0.0
    %2305 = vmatpush2.msra.mxu0 0.0
    %2306 = vmatprep.subr.mxu0 0.0
    %2307 = vmatpush2.msra.mxu0 0.0
    %2308 = vmatprep.subr.mxu0 0.0
    %2309 = vmatpush2.msra.mxu0 0.0
    %2310 = vmatprep.subr.mxu0 0.0
    %2311 = vmatpush2.msra.mxu0 0.0
    %2312 = vmatprep.subr.mxu0 0.0
    %2313 = vmatpush2.msra.mxu0 0.0
    %2314 = vmatprep.subr.mxu0 0.0
    %2315 = vmatpush2.msra.mxu0 0.0
    %2316 = vmatprep.subr.mxu0 0.0
    %2317 = vmatpush2.msra.mxu0 0.0
    %2318 = vmatprep.subr.mxu0 0.0
    %2319 = vmatpush2.msra.mxu0 0.0
    %2320 = vmatprep.subr.mxu0 0.0
    %2321 = vmatpush2.msra.mxu0 0.0
    %2322 = vmatprep.subr.mxu0 0.0
    %2323 = vmatpush2.msra.mxu0 0.0
    %2324 = vmatprep.mubr.f32.mxu0 0.0
    %2325 = vmatmul.mubr.f32.gmra.mxu0 %v2258
    %v2326 = vpop.f32.mrf.mxu0
    %v2327 = vadd.f32 0.0, %v2326
    %v2328 = vpop.f32.mrf.mxu0
    %2329 = vdwg.mxu0
    %v2330 = vtanh.pop %v2327
    %v2331 = vmul.f32 %v2330, 0.5
    %v2332 = vadd.f32 %v2331, 0.5
    %2333 = vst [vmem:[#allocation2] sm:$0x1] %v2332
    // Predicated region
    $region10: #{tpu_custom_call.1} parent=1 // pred_check
      _
    $region11: #{tpu_custom_call.1} parent=1 // pred_check_branch
      %2335 = sbr.rel (0) target = $region13
    $region12: #{tpu_custom_call.1} parent=1 // pred_region
      %s2337 = ssub.s32 16, 16
      %2338 = vsyncadd [#allocation3], %s2337
      %s2340 = sshll.u32 [#allocation2], 4
      %s2341 = int_to_ptr.vmem [resolvable:$true] %s2340
      %2343 = dma.vmem_to_hbm [thread:$0]  %s2341, 16, %s2, [#allocation3]
    $region13: #{tpu_custom_call.1} parent=1 // pred_fallthru
      _
    // Predicated region
    $region14: #{tpu_custom_call.1} parent=1 // pred_check
      _
    $region15: #{tpu_custom_call.1} parent=1 // pred_check_branch
      %2345 = sbr.rel (0) target = $region17
    $region16: #{tpu_custom_call.1} parent=1 // pred_region
      %2346 = dma.done [#allocation3], 16
    $region17: #{tpu_custom_call.1} parent=1 // pred_fallthru
      _
    %2347 = vsyncpa [#allocation3], 1

</llo_original>
